<compile_context>
chip_gen: v7x
topology: tpu7x:2x2x1
jax: 0.10.0
libtpu: 0.0.40
codegen_flags: <defaults>
</compile_context>

<pallas_src>
import functools

import jax
import jax.numpy as jnp
from jax.experimental import pallas as pl
from jax.experimental.pallas import tpu as pltpu

K = 4
STRIDE = 2
PAD = 1
LRELU_SLOPE = 0.01   # nn.LeakyReLU default
BN_EPS = 1e-5        # nn.BatchNorm2d default

LANE = 128
MAX_TILE_M = 512     # rows of output pixels per grid step
MAX_TILE_N = 512     # output-channel tile (multiple of 128; >=256 when OC allows)
MAX_TILE_K = 1024    # reduction (K*K*C) tile
MIN_M_STEPS = 2      # give both v7x TensorCores work on the parallel M axis
VMEM_LIMIT = 48 * 1024 * 1024


def _round_up(x, m):
    return (x + m - 1) // m * m


def _pick_tile_m(m, max_tile=MAX_TILE_M, min_steps=MIN_M_STEPS):
    """16-aligned M tile so that padded M wastes at most ~one tile."""
    steps = max(min_steps, -(-m // max_tile))
    return max(16, _round_up(-(-m // steps), 16))


def _pick_tile(total, cap, align=LANE):
    """Largest multiple-of-`align` divisor of `total` that is <= cap.

    `total` is always a multiple of `align` here, so `align` is a valid floor.
    """
    best = align
    for d in range(align, min(total, cap) + 1, align):
        if total % d == 0:
            best = d
    return best


# ---------------------------------------------------------------------------
# Pallas kernel: tiled conv-as-matmul with BN folded.
#   grid = (M tiles [parallel], OC tiles [parallel], K tiles [reduction])
# ---------------------------------------------------------------------------
def _conv_matmul_kernel(p_ref, w_ref, b_ref, o_ref, acc_ref):
    """patches (TM,TK) bf16 @ weight (TK,TN) bf16 -> f32 acc; +bias, LeakyReLU."""
    k = pl.program_id(2)

    @pl.when(k == 0)
    def _():
        acc_ref[...] = jnp.zeros_like(acc_ref)

    acc_ref[...] += jnp.dot(p_ref[...], w_ref[...],
                            preferred_element_type=jnp.float32)

    @pl.when(k == pl.num_programs(2) - 1)
    def _():
        acc = acc_ref[...] + b_ref[...]                         # folded conv+BN bias
        out = jnp.where(acc > 0, acc, LRELU_SLOPE * acc)        # LeakyReLU
        o_ref[...] = out.astype(o_ref.dtype)                    # bf16 (f32 last stage)
        # Dropout(0.1) is identity at inference -> nothing to do.


# ---------------------------------------------------------------------------
# Wrapper-side layout plumbing (plain JAX): bf16 im2col in NHWC, BN folding.
# ---------------------------------------------------------------------------
def _im2col_nhwc(x, k, stride, pad):
    """x: (N, H, W, C) -> patches (N*OH*OW, K*K*C), column order (KH, KW, C)."""
    xp = jnp.pad(x, ((0, 0), (pad, pad), (pad, pad), (0, 0)), mode="edge")
    n, hp, wp, c = xp.shape
    oh = (hp - k) // stride + 1
    ow = (wp - k) // stride + 1
    cols = []
    for i in range(k):
        for j in range(k):
            cols.append(xp[:, i:i + stride * oh:stride,
                           j:j + stride * ow:stride, :])
    p = jnp.stack(cols, axis=3)                  # (n, oh, ow, k*k, c)
    return p.reshape(n * oh * ow, k * k * c), oh, ow


def _fold_bn(p):
    """Fold eval-mode BatchNorm into the conv weight/bias (per out-channel)."""
    scale = p["gamma"] * jax.lax.rsqrt(p["var"] + BN_EPS)
    w = p["w"] * scale[:, None, None, None]                  # (OC, IC, K, K)
    b = (p["b"] - p["mean"]) * scale + p["beta"]             # (OC,)
    return w, b


def conv_bn_lrelu_stage(x_nhwc, p, *, out_dtype=jnp.bfloat16):
    """One encoder stage.  `x_nhwc` may carry zero-padded (lane-dense) channels.

    Returns (out_nhwc with oc_pad channels, real oc).
    """
    n, _, _, c_in = x_nhwc.shape
    oc, ic = p["w"].shape[0], p["w"].shape[1]
    oc_pad = _round_up(oc, LANE)                 # lane-dense output stores

    # --- fold BN, match weight layout to the carried (possibly padded) channels
    w_eff, b_eff = _fold_bn(p)
    if c_in > ic:                                # carried zero lanes -> zero weight rows
        w_eff = jnp.pad(w_eff, ((0, 0), (0, c_in - ic), (0, 0), (0, 0)))
    kdim = K * K * c_in
    kdim_pad = _round_up(kdim, LANE)             # lane-dense reduction dim
    # (OC, C, KH, KW) -> (KH, KW, C, OC) -> (K*K*C, OC): matches patch order.
    w_mat = w_eff.transpose(2, 3, 1, 0).reshape(kdim, oc)
    w_mat = jnp.pad(w_mat, ((0, kdim_pad - kdim),
                            (0, oc_pad - oc))).astype(jnp.bfloat16)
    b_row = jnp.pad(b_eff, (0, oc_pad - oc)).reshape(1, oc_pad).astype(jnp.float32)

    # --- bf16 im2col (input already bf16), pad K and M dims for clean tiles
    patches, oh, ow = _im2col_nhwc(x_nhwc, K, STRIDE, PAD)
    m = patches.shape[0]
    if kdim_pad > kdim:
        patches = jnp.pad(patches, ((0, 0), (0, kdim_pad - kdim)))

    tm = _pick_tile_m(m)
    m_pad = _round_up(m, tm)
    if m_pad > m:
        patches = jnp.pad(patches, ((0, m_pad - m), (0, 0)))
    tn = _pick_tile(oc_pad, MAX_TILE_N)
    tk = _pick_tile(kdim_pad, MAX_TILE_K)

    out = pl.pallas_call(
        _conv_matmul_kernel,
        out_shape=jax.ShapeDtypeStruct((m_pad, oc_pad), out_dtype),
        grid=(m_pad // tm, oc_pad // tn, kdim_pad // tk),
        in_specs=[
            pl.BlockSpec((tm, tk), lambda i, j, k: (i, k)),      # patches tile
            pl.BlockSpec((tk, tn), lambda i, j, k: (k, j)),      # folded weight tile
            pl.BlockSpec((1, tn), lambda i, j, k: (0, j)),       # folded bias row
        ],
        out_specs=pl.BlockSpec((tm, tn), lambda i, j, k: (i, j)),
        scratch_shapes=[pltpu.VMEM((tm, tn), jnp.float32)],      # f32 accumulator
        compiler_params=pltpu.CompilerParams(
            dimension_semantics=("parallel", "parallel", "arbitrary"),
            vmem_limit_bytes=VMEM_LIMIT),
    )(patches, w_mat, b_row)

    if m_pad > m:
        out = out[:m]
    # Keep the lane-padded OC channels (exact zeros) for the next stage:
    # no per-stage slice + re-pad relayout.
    return out.reshape(n, oh, ow, oc_pad), oc


def conv_encoder_forward(params, x_nchw):
    # One layout change + one dtype cast at the boundary; everything after is
    # NHWC bf16 until the final stage (which emits f32).
    h = jnp.transpose(x_nchw, (0, 2, 3, 1)).astype(jnp.bfloat16)
    n_stages = len(params["convs"])
    oc = x_nchw.shape[1]
    for s, p in enumerate(params["convs"]):
        last = s == n_stages - 1
        h, oc = conv_bn_lrelu_stage(
            h, p, out_dtype=jnp.float32 if last else jnp.bfloat16)
    h = h[..., :oc]                              # drop lane padding once, at the end
    return jnp.transpose(h, (0, 3, 1, 2))        # back to NCHW (PyTorch layout)


# ---------------------------------------------------------------------------
# Parameters (shapes from ConvEocoder.__init__), BN stats randomized so the
# folding path is actually exercised.
# ---------------------------------------------------------------------------
def init_params(key, in_channel, hidden_channels):
    channels = [in_channel] + list(hidden_channels)
    params = {"convs": []}
    for i in range(len(channels) - 1):
        key, kw, kb, kg, kbe, km, kv = jax.random.split(key, 7)
        cin, cout = channels[i], channels[i + 1]
        params["convs"].append({
            "w": jax.random.normal(kw, (cout, cin, K, K), jnp.float32) * 0.05,
            "b": jax.random.normal(kb, (cout,), jnp.float32) * 0.05,
            "gamma": 1.0 + 0.1 * jax.random.normal(kg, (cout,), jnp.float32),
            "beta": 0.1 * jax.random.normal(kbe, (cout,), jnp.float32),
            "mean": 0.1 * jax.random.normal(km, (cout,), jnp.float32),
            "var": jax.random.uniform(kv, (cout,), jnp.float32, 0.5, 1.5),
        })
    return params


# ---------------------------------------------------------------------------
# Pure-JAX (XLA) reference for correctness checking.
# ---------------------------------------------------------------------------
def reference_forward(params, x):
    h = x
    for p in params["convs"]:
        hp = jnp.pad(h, ((0, 0), (0, 0), (PAD, PAD), (PAD, PAD)), mode="edge")
        h = jax.lax.conv_general_dilated(
            hp, p["w"], window_strides=(STRIDE, STRIDE), padding="VALID",
            dimension_numbers=("NCHW", "OIHW", "NCHW"),
            precision=jax.lax.Precision.HIGHEST)
        h = h + p["b"][None, :, None, None]
        inv = jax.lax.rsqrt(p["var"] + BN_EPS)
        h = ((h - p["mean"][None, :, None, None]) * inv[None, :, None, None]
             * p["gamma"][None, :, None, None] + p["beta"][None, :, None, None])
        h = jnp.where(h > 0, h, LRELU_SLOPE * h)
    return h


if __name__ == "__main__":
    key = jax.random.PRNGKey(0)
    in_channel, hidden_channels = 4, [8, 16]
    in_shape = (16, 16)
    batch = 2

    kx, kp = jax.random.split(key)
    x = jax.random.normal(kx, (batch, in_channel, *in_shape), jnp.float32)
    params = init_params(kp, in_channel, hidden_channels)

    fwd = jax.jit(functools.partial(conv_encoder_forward, params))
    out = fwd(x)
    out = jax.block_until_ready(out)

    ref = reference_forward(params, x)
    expected_shape = (batch, hidden_channels[-1],
                      in_shape[0] // (2 ** len(hidden_channels)),
                      in_shape[1] // (2 ** len(hidden_channels)))
    assert out.shape == expected_shape, out.shape
    assert ref.shape == expected_shape, ref.shape
    assert bool(jnp.all(jnp.isfinite(out)))
    err = float(jnp.max(jnp.abs(out - ref)))
    assert err < 5e-2, f"max abs diff vs reference too large: {err}"
    print("KERNEL_OK")
</pallas_src>

<mosaic_0001>
module attributes {stable_mosaic.version = 11 : i64} {
  func.func @_conv_matmul_kernel(%arg0: i32, %arg1: i32, %arg2: i32, %arg3: memref<64x128xbf16, #tpu.memory_space<vmem>>, %arg4: memref<128x128xbf16, #tpu.memory_space<vmem>>, %arg5: memref<1x128xf32, #tpu.memory_space<vmem>>, %arg6: memref<64x128xbf16, #tpu.memory_space<vmem>>, %arg7: memref<64x128xf32, #tpu.memory_space<vmem>>) attributes {dimension_semantics = [#tpu.dimension_semantics<parallel>, #tpu.dimension_semantics<parallel>, #tpu.dimension_semantics<arbitrary>], iteration_bounds = array<i64: 2, 1, 1>, scalar_prefetch = 0 : i64, scratch_operands = 1 : i64, tpu.core_type = #tpu.core_type<tc>, window_params = [{transform_indices = @transform_0, window_bounds = array<i64: 64, 128>}, {transform_indices = @transform_1, window_bounds = array<i64: 128, 128>}, {transform_indices = @transform_2, window_bounds = array<i64: 1, 128>}, {transform_indices = @transform_3, window_bounds = array<i64: 64, 128>}]} {
    %c0_i32 = arith.constant 0 : i32
    %0 = arith.cmpi eq, %arg2, %c0_i32 : i32
    %1 = arith.extui %0 : i1 to i32
    %c0_i32_0 = arith.constant 0 : i32
    %2 = arith.cmpi ne, %1, %c0_i32_0 : i32
    scf.if %2 {
      %cst_10 = arith.constant 0.000000e+00 : f32
      %12 = vector.broadcast %cst_10 : f32 to vector<64x128xf32>
      %c0_11 = arith.constant 0 : index
      %c0_12 = arith.constant 0 : index
      %13 = vector.load %arg7[%c0_11, %c0_12] : memref<64x128xf32, #tpu.memory_space<vmem>>, vector<64x128xf32>
      tpu.vector_store %arg7[%c0_11, %c0_12], %12 {strides = array<i32>} : memref<64x128xf32, #tpu.memory_space<vmem>>, vector<64x128xf32>,
    } else {
    }
    %c0 = arith.constant 0 : index
    %c0_1 = arith.constant 0 : index
    %3 = vector.load %arg7[%c0, %c0_1] : memref<64x128xf32, #tpu.memory_space<vmem>>, vector<64x128xf32>
    %c0_2 = arith.constant 0 : index
    %c0_3 = arith.constant 0 : index
    %4 = vector.load %arg3[%c0_2, %c0_3] : memref<64x128xbf16, #tpu.memory_space<vmem>>, vector<64x128xbf16>
    %c0_4 = arith.constant 0 : index
    %c0_5 = arith.constant 0 : index
    %5 = vector.load %arg4[%c0_4, %c0_5] : memref<128x128xbf16, #tpu.memory_space<vmem>>, vector<128x128xbf16>
    %cst = arith.constant dense<0.000000e+00> : vector<64x128xf32>
    %6 = tpu.matmul %4, %5, %cst {dimension_numbers = #tpu.dot_dimension_numbers<[1], [0], [0], [1], [0, 0, 1, 1], [], []>} : vector<64x128xbf16>, vector<128x128xbf16>, vector<64x128xf32> -> vector<64x128xf32>
    %7 = arith.addf %3, %6 : vector<64x128xf32>
    %c0_6 = arith.constant 0 : index
    %c0_7 = arith.constant 0 : index
    %8 = vector.load %arg7[%c0_6, %c0_7] : memref<64x128xf32, #tpu.memory_space<vmem>>, vector<64x128xf32>
    tpu.vector_store %arg7[%c0_6, %c0_7], %7 {strides = array<i32>} : memref<64x128xf32, #tpu.memory_space<vmem>>, vector<64x128xf32>,
    %c0_i32_8 = arith.constant 0 : i32
    %9 = arith.cmpi eq, %arg2, %c0_i32_8 : i32
    %10 = arith.extui %9 : i1 to i32
    %c0_i32_9 = arith.constant 0 : i32
    %11 = arith.cmpi ne, %10, %c0_i32_9 : i32
    scf.if %11 {
      %c0_10 = arith.constant 0 : index
      %c0_11 = arith.constant 0 : index
      %12 = vector.load %arg7[%c0_10, %c0_11] : memref<64x128xf32, #tpu.memory_space<vmem>>, vector<64x128xf32>
      %c0_12 = arith.constant 0 : index
      %c0_13 = arith.constant 0 : index
      %13 = vector.load %arg5[%c0_12, %c0_13] : memref<1x128xf32, #tpu.memory_space<vmem>>, vector<1x128xf32>
      %14 = vector.broadcast %13 : vector<1x128xf32> to vector<64x128xf32>
      %15 = arith.addf %12, %14 : vector<64x128xf32>
      %cst_14 = arith.constant 0.000000e+00 : f32
      %16 = vector.broadcast %cst_14 : f32 to vector<64x128xf32>
      %17 = arith.cmpf ogt, %15, %16 : vector<64x128xf32>
      %cst_15 = arith.constant 0.00999999977 : f32
      %18 = vector.broadcast %cst_15 : f32 to vector<64x128xf32>
      %19 = arith.mulf %18, %15 : vector<64x128xf32>
      %20 = arith.select %17, %15, %19 : vector<64x128xi1>, vector<64x128xf32>
      %21 = arith.truncf %20 : vector<64x128xf32> to vector<64x128xbf16>
      %c0_16 = arith.constant 0 : index
      %c0_17 = arith.constant 0 : index
      %22 = vector.load %arg6[%c0_16, %c0_17] : memref<64x128xbf16, #tpu.memory_space<vmem>>, vector<64x128xbf16>
      tpu.vector_store %arg6[%c0_16, %c0_17], %21 {strides = array<i32>} : memref<64x128xbf16, #tpu.memory_space<vmem>>, vector<64x128xbf16>,
    } else {
    }
    return
  }
  func.func @transform_0(%arg0: i32, %arg1: i32, %arg2: i32) -> (i32, i32) {
    %c0_i32 = arith.constant 0 : i32
    return %arg0, %arg2 : i32, i32
  }
  func.func @transform_1(%arg0: i32, %arg1: i32, %arg2: i32) -> (i32, i32) {
    %c0_i32 = arith.constant 0 : i32
    return %arg2, %arg1 : i32, i32
  }
  func.func @transform_2(%arg0: i32, %arg1: i32, %arg2: i32) -> (i32, i32) {
    %c0_i32 = arith.constant 0 : i32
    %c0_i32_0 = arith.constant 0 : i32
    return %c0_i32, %arg1 : i32, i32
  }
  func.func @transform_3(%arg0: i32, %arg1: i32, %arg2: i32) -> (i32, i32) {
    %c0_i32 = arith.constant 0 : i32
    return %arg0, %arg1 : i32, i32
  }
}

module attributes {stable_mosaic.version = 11 : i64} {
  func.func @_conv_matmul_kernel(%arg0: i32, %arg1: i32, %arg2: i32, %arg3: memref<16x1024xbf16, #tpu.memory_space<vmem>>, %arg4: memref<1024x128xbf16, #tpu.memory_space<vmem>>, %arg5: memref<1x128xf32, #tpu.memory_space<vmem>>, %arg6: memref<16x128xf32, #tpu.memory_space<vmem>>, %arg7: memref<16x128xf32, #tpu.memory_space<vmem>>) attributes {dimension_semantics = [#tpu.dimension_semantics<parallel>, #tpu.dimension_semantics<parallel>, #tpu.dimension_semantics<arbitrary>], iteration_bounds = array<i64: 2, 1, 2>, scalar_prefetch = 0 : i64, scratch_operands = 1 : i64, tpu.core_type = #tpu.core_type<tc>, window_params = [{transform_indices = @transform_0, window_bounds = array<i64: 16, 1024>}, {transform_indices = @transform_1, window_bounds = array<i64: 1024, 128>}, {transform_indices = @transform_2, window_bounds = array<i64: 1, 128>}, {transform_indices = @transform_3, window_bounds = array<i64: 16, 128>}]} {
    %c0_i32 = arith.constant 0 : i32
    %0 = arith.cmpi eq, %arg2, %c0_i32 : i32
    %1 = arith.extui %0 : i1 to i32
    %c0_i32_0 = arith.constant 0 : i32
    %2 = arith.cmpi ne, %1, %c0_i32_0 : i32
    scf.if %2 {
      %cst_9 = arith.constant 0.000000e+00 : f32
      %12 = vector.broadcast %cst_9 : f32 to vector<16x128xf32>
      %c0_10 = arith.constant 0 : index
      %c0_11 = arith.constant 0 : index
      %13 = vector.load %arg7[%c0_10, %c0_11] : memref<16x128xf32, #tpu.memory_space<vmem>>, vector<16x128xf32>
      tpu.vector_store %arg7[%c0_10, %c0_11], %12 {strides = array<i32>} : memref<16x128xf32, #tpu.memory_space<vmem>>, vector<16x128xf32>,
    } else {
    }
    %c0 = arith.constant 0 : index
    %c0_1 = arith.constant 0 : index
    %3 = vector.load %arg7[%c0, %c0_1] : memref<16x128xf32, #tpu.memory_space<vmem>>, vector<16x128xf32>
    %c0_2 = arith.constant 0 : index
    %c0_3 = arith.constant 0 : index
    %4 = vector.load %arg3[%c0_2, %c0_3] : memref<16x1024xbf16, #tpu.memory_space<vmem>>, vector<16x1024xbf16>
    %c0_4 = arith.constant 0 : index
    %c0_5 = arith.constant 0 : index
    %5 = vector.load %arg4[%c0_4, %c0_5] : memref<1024x128xbf16, #tpu.memory_space<vmem>>, vector<1024x128xbf16>
    %cst = arith.constant dense<0.000000e+00> : vector<16x128xf32>
    %6 = tpu.matmul %4, %5, %cst {dimension_numbers = #tpu.dot_dimension_numbers<[1], [0], [0], [1], [0, 0, 1, 1], [], []>} : vector<16x1024xbf16>, vector<1024x128xbf16>, vector<16x128xf32> -> vector<16x128xf32>
    %7 = arith.addf %3, %6 : vector<16x128xf32>
    %c0_6 = arith.constant 0 : index
    %c0_7 = arith.constant 0 : index
    %8 = vector.load %arg7[%c0_6, %c0_7] : memref<16x128xf32, #tpu.memory_space<vmem>>, vector<16x128xf32>
    tpu.vector_store %arg7[%c0_6, %c0_7], %7 {strides = array<i32>} : memref<16x128xf32, #tpu.memory_space<vmem>>, vector<16x128xf32>,
    %c1_i32 = arith.constant 1 : i32
    %9 = arith.cmpi eq, %arg2, %c1_i32 : i32
    %10 = arith.extui %9 : i1 to i32
    %c0_i32_8 = arith.constant 0 : i32
    %11 = arith.cmpi ne, %10, %c0_i32_8 : i32
    scf.if %11 {
      %c0_9 = arith.constant 0 : index
      %c0_10 = arith.constant 0 : index
      %12 = vector.load %arg7[%c0_9, %c0_10] : memref<16x128xf32, #tpu.memory_space<vmem>>, vector<16x128xf32>
      %c0_11 = arith.constant 0 : index
      %c0_12 = arith.constant 0 : index
      %13 = vector.load %arg5[%c0_11, %c0_12] : memref<1x128xf32, #tpu.memory_space<vmem>>, vector<1x128xf32>
      %14 = vector.broadcast %13 : vector<1x128xf32> to vector<16x128xf32>
      %15 = arith.addf %12, %14 : vector<16x128xf32>
      %cst_13 = arith.constant 0.000000e+00 : f32
      %16 = vector.broadcast %cst_13 : f32 to vector<16x128xf32>
      %17 = arith.cmpf ogt, %15, %16 : vector<16x128xf32>
      %cst_14 = arith.constant 0.00999999977 : f32
      %18 = vector.broadcast %cst_14 : f32 to vector<16x128xf32>
      %19 = arith.mulf %18, %15 : vector<16x128xf32>
      %20 = arith.select %17, %15, %19 : vector<16x128xi1>, vector<16x128xf32>
      %c0_15 = arith.constant 0 : index
      %c0_16 = arith.constant 0 : index
      %21 = vector.load %arg6[%c0_15, %c0_16] : memref<16x128xf32, #tpu.memory_space<vmem>>, vector<16x128xf32>
      tpu.vector_store %arg6[%c0_15, %c0_16], %20 {strides = array<i32>} : memref<16x128xf32, #tpu.memory_space<vmem>>, vector<16x128xf32>,
    } else {
    }
    return
  }
  func.func @transform_0(%arg0: i32, %arg1: i32, %arg2: i32) -> (i32, i32) {
    %c0_i32 = arith.constant 0 : i32
    return %arg0, %arg2 : i32, i32
  }
  func.func @transform_1(%arg0: i32, %arg1: i32, %arg2: i32) -> (i32, i32) {
    %c0_i32 = arith.constant 0 : i32
    return %arg2, %arg1 : i32, i32
  }
  func.func @transform_2(%arg0: i32, %arg1: i32, %arg2: i32) -> (i32, i32) {
    %c0_i32 = arith.constant 0 : i32
    %c0_i32_0 = arith.constant 0 : i32
    return %c0_i32, %arg1 : i32, i32
  }
  func.func @transform_3(%arg0: i32, %arg1: i32, %arg2: i32) -> (i32, i32) {
    %c0_i32 = arith.constant 0 : i32
    return %arg0, %arg1 : i32, i32
  }
}

</mosaic_0001>

<llo_original>
// kernel: conv_encoder_forward.2
$region0: #{conv_encoder_forward.2}
  #allocation0 [shape = 'u32[]', space=smem, size = 0x4, offset = 0x4, fixed_abs, tag = 'smem constant byte address 0x4 - core index']
  #allocation1 [shape = 'u32[144,128]{1,0:T(1,128)}', space=vmem, size = 0x12000, scoped, tag = 'internal scratch']
  #allocation2 [shape = 'f32[64,128]{1,0:T(8,128)}', space=vmem, size = 0x8000, scoped, tag = 'scratch operand']
  %s0 = inlined_call_operand.vmem [shape: bf16[128,128], index: 0, kind: input, shape index: {}]
  %s1 = inlined_call_operand.vmem [shape: bf16[128,128], index: 1, kind: input, shape index: {}]
  %s2 = inlined_call_operand.vmem [shape: f32[1,128], index: 2, kind: input, shape index: {}]
  %s3 = inlined_call_operand.vmem [shape: bf16[128,128], index: 3, kind: output, shape index: {}]
  %s4 = sld [smem:[#allocation0]]
  $region53: #{conv_encoder_forward.2} parent=0
    _
  %s6 = ssub.s32 1, %s4
  %s7 = scalar_select 0, %s6, %s4
  loop: start=0, step=1, limit=4
  $region2: #{conv_encoder_forward.2} parent=0 // loop_pre_header
    _
  $region3: #{conv_encoder_forward.2} parent=0 // loop_header
    %s9 = sphi 0, %s13
    %p10 = scmp.ge.s32.totalorder %s9, 4
    %s16 = sphi 0, %s35
    %s17 = sphi 0, %s31
    %s18 = sphi 0, %s27
    %s19 = sphi 0, %s16
    %s20 = sphi 0, %s17
    %s21 = sphi 0, %s18
    %s22 = sphi 0, %s19
    %s23 = sphi 0, %s20
    %s24 = sphi 0, %s21
    %s40 = sphi 0, %s42
    %s43 = sphi 0, %s40
    %s44 = sphi 0, %s43
    %s60 = sphi 0, %s44
    %s68 = sphi 0, %s70
    %s71 = sphi 0, %s68
    %s72 = sphi 0, %s71
    %s88 = sphi 0, %s72
    %s94 = sphi 0, %s96
    %s97 = sphi 0, %s94
    %s98 = sphi 0, %s97
    %s114 = sphi 0, %s98
    %s122 = sphi 0, %s124
    %s125 = sphi 0, %s122
    %s126 = sphi 0, %s125
    %s142 = sphi 0, %s126
  $region4: #{conv_encoder_forward.2} parent=0 // loop_header_branch
    %12 = sbr.rel (%p10) target = $region8
  $region5: #{conv_encoder_forward.2} parent=0 // loop_body
    %s14 = ssub.s32 %s9, 1
    %s15 = ssub.s32 %s9, 2
    %s25 = sadd.s32 1, %s18
    %p26 = scmp.ge.s32.totalorder %s25, 1
    %s27 = scalar_select %p26, 0, %s25
    %s28 = sadd.s32 1, %s17
    %s29 = scalar_select %p26, %s28, %s17
    %p30 = scmp.ge.s32.totalorder %s29, 1
    %s31 = scalar_select %p30, 0, %s29
    %s32 = sadd.s32 1, %s16
    %s33 = scalar_select %p30, %s32, %s16
    %p34 = scmp.ge.s32.totalorder %s33, 2
    %s35 = scalar_select %p34, 0, %s33
    %s36 = ssub.s32 %s16, %s35
    %s37 = ssub.s32 %s18, %s27
    %s38 = sor.u32 %s36, %s37
    %p39 = scmp.eq.s32.totalorder %s38, 0
    %s41 = sadd.s32 %s40, 1
    %s42 = scalar_select %p39, %s40, %s41
    %p45 = pneg %p39
    %p46 = scmp.eq.s32.totalorder %s9, 1
    %p47 = por %p45, %p46
    %p48 = scmp.ne.s32.totalorder %s40, %s43
    %p49 = scmp.eq.s32.totalorder %s9, 0
    %p50 = por %p48, %p49
    %p51 = scmp.ne.s32.totalorder %s40, %s43
    %p52 = scmp.eq.s32.totalorder %s14, 1
    %p53 = por %p51, %p52
    %p54 = scmp.ne.s32.totalorder %s43, %s44
    %p55 = scmp.eq.s32.totalorder %s14, 0
    %p56 = por %p54, %p55
    %p57 = scmp.ne.s32.totalorder %s43, %s44
    %p58 = scmp.eq.s32.totalorder %s15, 1
    %p59 = por %p57, %p58
    %p61 = scmp.ne.s32.totalorder %s44, %s60
    %p62 = scmp.eq.s32.totalorder %s15, 0
    %p63 = por %p61, %p62
    %s64 = ssub.s32 %s18, %s27
    %s65 = ssub.s32 %s17, %s31
    %s66 = sor.u32 %s64, %s65
    %p67 = scmp.eq.s32.totalorder %s66, 0
    %s69 = sadd.s32 %s68, 1
    %s70 = scalar_select %p67, %s68, %s69
    %p73 = pneg %p67
    %p74 = scmp.eq.s32.totalorder %s9, 1
    %p75 = por %p73, %p74
    %p76 = scmp.ne.s32.totalorder %s68, %s71
    %p77 = scmp.eq.s32.totalorder %s9, 0
    %p78 = por %p76, %p77
    %p79 = scmp.ne.s32.totalorder %s68, %s71
    %p80 = scmp.eq.s32.totalorder %s14, 1
    %p81 = por %p79, %p80
    %p82 = scmp.ne.s32.totalorder %s71, %s72
    %p83 = scmp.eq.s32.totalorder %s14, 0
    %p84 = por %p82, %p83
    %p85 = scmp.ne.s32.totalorder %s71, %s72
    %p86 = scmp.eq.s32.totalorder %s15, 1
    %p87 = por %p85, %p86
    %p89 = scmp.ne.s32.totalorder %s72, %s88
    %p90 = scmp.eq.s32.totalorder %s15, 0
    %p91 = por %p89, %p90
    %s92 = ssub.s32 %s17, %s31
    %p93 = scmp.eq.s32.totalorder %s92, 0
    %s95 = sadd.s32 %s94, 1
    %s96 = scalar_select %p93, %s94, %s95
    %p99 = pneg %p93
    %p100 = scmp.eq.s32.totalorder %s9, 1
    %p101 = por %p99, %p100
    %p102 = scmp.ne.s32.totalorder %s94, %s97
    %p103 = scmp.eq.s32.totalorder %s9, 0
    %p104 = por %p102, %p103
    %p105 = scmp.ne.s32.totalorder %s94, %s97
    %p106 = scmp.eq.s32.totalorder %s14, 1
    %p107 = por %p105, %p106
    %p108 = scmp.ne.s32.totalorder %s97, %s98
    %p109 = scmp.eq.s32.totalorder %s14, 0
    %p110 = por %p108, %p109
    %p111 = scmp.ne.s32.totalorder %s97, %s98
    %p112 = scmp.eq.s32.totalorder %s15, 1
    %p113 = por %p111, %p112
    %p115 = scmp.ne.s32.totalorder %s98, %s114
    %p116 = scmp.eq.s32.totalorder %s15, 0
    %p117 = por %p115, %p116
    %s118 = ssub.s32 %s16, %s35
    %s119 = ssub.s32 %s17, %s31
    %s120 = sor.u32 %s118, %s119
    %p121 = scmp.eq.s32.totalorder %s120, 0
    %s123 = sadd.s32 %s122, 1
    %s124 = scalar_select %p121, %s122, %s123
    %p127 = pneg %p121
    %p128 = scmp.eq.s32.totalorder %s9, 1
    %p129 = por %p127, %p128
    %p130 = scmp.ne.s32.totalorder %s122, %s125
    %p131 = scmp.eq.s32.totalorder %s9, 0
    %p132 = por %p130, %p131
    %p133 = scmp.ne.s32.totalorder %s122, %s125
    %p134 = scmp.eq.s32.totalorder %s14, 1
    %p135 = por %p133, %p134
    %p136 = scmp.ne.s32.totalorder %s125, %s126
    %p137 = scmp.eq.s32.totalorder %s14, 0
    %p138 = por %p136, %p137
    %p139 = scmp.ne.s32.totalorder %s125, %s126
    %p140 = scmp.eq.s32.totalorder %s15, 1
    %p141 = por %p139, %p140
    %p143 = scmp.ne.s32.totalorder %s126, %s142
    %p144 = scmp.eq.s32.totalorder %s15, 0
    %p145 = por %p143, %p144
    %p146 = scmp.le.s32.totalorder 1, %s9
    %p147 = scmp.lt.s32.totalorder %s9, 3
    %p148 = pnand %p146, %p147
    %p149 = pneg %p148
    // Predicated region
    $region9: #{conv_encoder_forward.2} parent=5 // pred_check
      _
    $region10: #{conv_encoder_forward.2} parent=5 // pred_check_branch
      %151 = sbr.rel (%p148) target = $region12
    $region11: #{conv_encoder_forward.2} parent=5 // pred_region
      %s152 = ssub.s32 %s9, 1
      // Predicated region
      $region13: #{conv_encoder_forward.2} parent=11 // pred_check
        %p153 = pneg %p84
      $region14: #{conv_encoder_forward.2} parent=11 // pred_check_branch
        %155 = sbr.rel (%p153) target = $region16
      $region15: #{conv_encoder_forward.2} parent=11 // pred_region
        %s156 = smul.u32 16, %s21
        %p157 = scmp.lt.s32.totalorder %s156, 15
        %s158 = scalar_select %p157, %s156, 15
        %p159 = scmp.lt.s32.totalorder %s20, 0
        %s160 = scalar_select %p159, %s20, 0
        %s161 = sadd.s32 %s160, %s158
        %s162 = smul.addr %s161, 4
        %s163 = scalar_lea.vmem %s1, %s162
        %s164 = smul.u32 16, %s21
      $region16: #{conv_encoder_forward.2} parent=11 // pred_fallthru
        _
      // Predicated region
      $region17: #{conv_encoder_forward.2} parent=11 // pred_check
        %p165 = pneg %p110
      $region18: #{conv_encoder_forward.2} parent=11 // pred_check_branch
        %167 = sbr.rel (%p165) target = $region20
      $region19: #{conv_encoder_forward.2} parent=11 // pred_region
        %p168 = scmp.lt.s32.totalorder %s20, 0
        %s169 = scalar_select %p168, %s20, 0
        %s170 = scalar_lea.vmem %s2, %s169
      $region20: #{conv_encoder_forward.2} parent=11 // pred_fallthru
        _
    $region12: #{conv_encoder_forward.2} parent=5 // pred_fallthru
      _
    %p171 = scmp.lt.s32.totalorder %s9, 2
    // Predicated region
    $region21: #{conv_encoder_forward.2} parent=5 // pred_check
      %p172 = pneg %p171
    $region22: #{conv_encoder_forward.2} parent=5 // pred_check_branch
      %174 = sbr.rel (%p172) target = $region24
    $region23: #{conv_encoder_forward.2} parent=5 // pred_region
      // Predicated region
      $region25: #{conv_encoder_forward.2} parent=23 // pred_check
        %p175 = pneg %p50
      $region26: #{conv_encoder_forward.2} parent=23 // pred_check_branch
        %177 = sbr.rel (%p175) target = $region28
      $region27: #{conv_encoder_forward.2} parent=23 // pred_region
        %s178 = smul.u32 8, %s16
        %p179 = scmp.lt.s32.totalorder %s178, 15
        %s180 = scalar_select %p179, %s178, 15
        %p181 = scmp.lt.s32.totalorder %s18, 0
        %s182 = scalar_select %p181, %s18, 0
        %s183 = sadd.s32 %s182, %s180
        %s184 = smul.addr %s183, 4
        %s185 = scalar_lea.vmem %s0, %s184
        %s186 = smul.u32 8, %s16
      $region28: #{conv_encoder_forward.2} parent=23 // pred_fallthru
        _
    $region24: #{conv_encoder_forward.2} parent=5 // pred_fallthru
      _
    %p187 = scmp.le.s32.totalorder 1, %s9
    %p188 = scmp.lt.s32.totalorder %s9, 3
    %p189 = pnand %p187, %p188
    %p190 = pneg %p189
    // Predicated region
    $region29: #{conv_encoder_forward.2} parent=5 // pred_check
      _
    $region30: #{conv_encoder_forward.2} parent=5 // pred_check_branch
      %192 = sbr.rel (%p189) target = $region32
    $region31: #{conv_encoder_forward.2} parent=5 // pred_region
      %s193 = ssub.s32 %s9, 1
      %s194 = smul.u32 8, %s19
      %p195 = scmp.lt.s32.totalorder %s194, 15
      %s196 = scalar_select %p195, %s194, 15
      %p197 = scmp.lt.s32.totalorder %s21, 0
      %s198 = scalar_select %p197, %s21, 0
      %s199 = sadd.s32 %s198, %s196
      %s200 = smul.addr %s199, 4
      %s201 = scalar_lea.vmem %s0, %s200
      %p202 = pneg %p56
      %p203 = pneg %p53
      %s204 = smul.u32 16, %s21
      %p205 = scmp.lt.s32.totalorder %s204, 15
      %s206 = scalar_select %p205, %s204, 15
      %p207 = scmp.lt.s32.totalorder %s20, 0
      %s208 = scalar_select %p207, %s20, 0
      %s209 = sadd.s32 %s208, %s206
      %s210 = smul.addr %s209, 4
      %s211 = scalar_lea.vmem %s1, %s210
      %p212 = pneg %p84
      %p213 = pneg %p81
      %p214 = scmp.lt.s32.totalorder %s20, 0
      %s215 = scalar_select %p214, %s20, 0
      %s216 = scalar_lea.vmem %s2, %s215
      %p217 = pneg %p110
      %p218 = pneg %p107
      %p219 = pneg %p138
      %p220 = pneg %p135
      %s221 = smul.u32 8, %s19
      %p222 = scmp.lt.s32.totalorder %s221, 15
      %s223 = scalar_select %p222, %s221, 15
      %p224 = scmp.lt.s32.totalorder %s20, 0
      %s225 = scalar_select %p224, %s20, 0
      %s226 = sadd.s32 %s225, %s223
      %s227 = smul.addr %s226, 4
      %s228 = scalar_lea.vmem %s3, %s227
      %s229 = smul.u32 8, %s19
      %p230 = scmp.lt.s32.totalorder %s229, 15
      %s231 = scalar_select %p230, %s229, 15
      %p232 = scmp.lt.s32.totalorder %s21, 0
      %s233 = scalar_select %p232, %s21, 0
      %s234 = sadd.s32 %s233, %s231
      %s235 = smul.addr %s234, 4
      %s236 = scalar_lea.vmem %s0, %s235
      %s237 = smul.u32 8, %s19
      %s238 = smul.u32 16, %s21
      %p239 = scmp.lt.s32.totalorder %s238, 15
      %s240 = scalar_select %p239, %s238, 15
      %p241 = scmp.lt.s32.totalorder %s20, 0
      %s242 = scalar_select %p241, %s20, 0
      %s243 = sadd.s32 %s242, %s240
      %s244 = smul.addr %s243, 4
      %s245 = scalar_lea.vmem %s1, %s244
      %s246 = smul.u32 16, %s21
      %p247 = scmp.lt.s32.totalorder %s20, 0
      %s248 = scalar_select %p247, %s20, 0
      %s249 = scalar_lea.vmem %s2, %s248
      %s250 = smul.u32 8, %s19
      %p251 = scmp.lt.s32.totalorder %s250, 15
      %s252 = scalar_select %p251, %s250, 15
      %p253 = scmp.lt.s32.totalorder %s20, 0
      %s254 = scalar_select %p253, %s20, 0
      %s255 = sadd.s32 %s254, %s252
      %s256 = smul.addr %s255, 4
      %s257 = scalar_lea.vmem %s3, %s256
      %s258 = smul.u32 8, %s19
      %p260 = scmp.eq.s32.totalorder %s21, 0
      // Predicated region
      $region33: #{conv_encoder_forward.2} parent=31 // pred_check
        %p261 = pneg %p260
      $region34: #{conv_encoder_forward.2} parent=31 // pred_check_branch
        %263 = sbr.rel (%p261) target = $region36
      $region35: #{conv_encoder_forward.2} parent=31 // pred_region
        %264 = vst [vmem:[#allocation2] sm:$0xff] 0.0
        %265 = vst [vmem:[#allocation2 + $0x8] sm:$0xff] 0.0
        %266 = vst [vmem:[#allocation2 + $0x10] sm:$0xff] 0.0
        %267 = vst [vmem:[#allocation2 + $0x18] sm:$0xff] 0.0
        %268 = vst [vmem:[#allocation2 + $0x20] sm:$0xff] 0.0
        %269 = vst [vmem:[#allocation2 + $0x28] sm:$0xff] 0.0
        %270 = vst [vmem:[#allocation2 + $0x30] sm:$0xff] 0.0
        %271 = vst [vmem:[#allocation2 + $0x38] sm:$0xff] 0.0
      $region36: #{conv_encoder_forward.2} parent=31 // pred_fallthru
        _
      %v272 = vld [vmem:[#allocation2] sm:$0xff]
      %v273 = vld [vmem:[#allocation2 + $0x8] sm:$0xff]
      %v274 = vld [vmem:[#allocation2 + $0x10] sm:$0xff]
      %v275 = vld [vmem:[#allocation2 + $0x18] sm:$0xff]
      %v276 = vld [vmem:[#allocation2 + $0x20] sm:$0xff]
      %v277 = vld [vmem:[#allocation2 + $0x28] sm:$0xff]
      %v278 = vld [vmem:[#allocation2 + $0x30] sm:$0xff]
      %v279 = vld [vmem:[#allocation2 + $0x38] sm:$0xff]
      %v280 = vld [vmem:[%s236] sm:$0xf]
      %v281 = vld [vmem:[%s236 + $0x4] sm:$0xf]
      %v282 = vld [vmem:[%s236 + $0x8] sm:$0xf]
      %v283 = vld [vmem:[%s236 + $0xc] sm:$0xf]
      %v284 = vld [vmem:[%s236 + $0x10] sm:$0xf]
      %v285 = vld [vmem:[%s236 + $0x14] sm:$0xf]
      %v286 = vld [vmem:[%s236 + $0x18] sm:$0xf]
      %v287 = vld [vmem:[%s236 + $0x1c] sm:$0xf]
      %v288 = vld [vmem:[%s245] sm:$0xf]
      %v289 = vld [vmem:[%s245 + $0x4] sm:$0xf]
      %v290 = vld [vmem:[%s245 + $0x8] sm:$0xf]
      %v291 = vld [vmem:[%s245 + $0xc] sm:$0xf]
      %v292 = vld [vmem:[%s245 + $0x10] sm:$0xf]
      %v293 = vld [vmem:[%s245 + $0x14] sm:$0xf]
      %v294 = vld [vmem:[%s245 + $0x18] sm:$0xf]
      %v295 = vld [vmem:[%s245 + $0x1c] sm:$0xf]
      %v296 = vld [vmem:[%s245 + $0x20] sm:$0xf]
      %v297 = vld [vmem:[%s245 + $0x24] sm:$0xf]
      %v298 = vld [vmem:[%s245 + $0x28] sm:$0xf]
      %v299 = vld [vmem:[%s245 + $0x2c] sm:$0xf]
      %v300 = vld [vmem:[%s245 + $0x30] sm:$0xf]
      %v301 = vld [vmem:[%s245 + $0x34] sm:$0xf]
      %v302 = vld [vmem:[%s245 + $0x38] sm:$0xf]
      %v303 = vld [vmem:[%s245 + $0x3c] sm:$0xf]
      %v312 = vunpack.c.l.b16 %v280
      %v313 = vunpack.c.l.b16 %v281
      %v314 = vunpack.c.l.b16 %v282
      %v315 = vunpack.c.l.b16 %v283
      %v316 = vunpack.c.l.b16 %v284
      %v317 = vunpack.c.l.b16 %v285
      %v318 = vunpack.c.l.b16 %v286
      %v319 = vunpack.c.l.b16 %v287
      %v320 = vpack.c.b16 %v313, %v312
      %v321 = vpack.c.b16 %v315, %v314
      %v322 = vpack.c.b16 %v317, %v316
      %v323 = vpack.c.b16 %v319, %v318
      %v344 = vunpack.c.l.b16 %v288
      %v345 = vunpack.c.l.b16 %v289
      %v346 = vunpack.c.l.b16 %v290
      %v347 = vunpack.c.l.b16 %v291
      %v348 = vunpack.c.l.b16 %v292
      %v349 = vunpack.c.l.b16 %v293
      %v350 = vunpack.c.l.b16 %v294
      %v351 = vunpack.c.l.b16 %v295
      %v352 = vunpack.c.l.b16 %v296
      %v353 = vunpack.c.l.b16 %v297
      %v354 = vunpack.c.l.b16 %v298
      %v355 = vunpack.c.l.b16 %v299
      %v356 = vunpack.c.l.b16 %v300
      %v357 = vunpack.c.l.b16 %v301
      %v358 = vunpack.c.l.b16 %v302
      %v359 = vunpack.c.l.b16 %v303
      %v360 = vpack.c.b16 %v345, %v344
      %v361 = vpack.c.b16 %v347, %v346
      %v362 = vpack.c.b16 %v349, %v348
      %v363 = vpack.c.b16 %v351, %v350
      %v364 = vpack.c.b16 %v353, %v352
      %v365 = vpack.c.b16 %v355, %v354
      %v366 = vpack.c.b16 %v357, %v356
      %v367 = vpack.c.b16 %v359, %v358
      %376 = vmatprep.subr.bf16.mxu0 0
      %377 = vmatpush1.bf16.msra.mxu0 %v360
      %378 = vmatprep.subr.bf16.mxu0 0
      %379 = vmatpush1.bf16.msra.mxu0 %v361
      %380 = vmatprep.subr.bf16.mxu0 0
      %381 = vmatpush1.bf16.msra.mxu0 %v362
      %382 = vmatprep.subr.bf16.mxu0 0
      %383 = vmatpush1.bf16.msra.mxu0 %v363
      %384 = vmatprep.subr.bf16.mxu0 0
      %385 = vmatpush1.bf16.msra.mxu0 %v364
      %386 = vmatprep.subr.bf16.mxu0 0
      %387 = vmatpush1.bf16.msra.mxu0 %v365
      %388 = vmatprep.subr.bf16.mxu0 0
      %389 = vmatpush1.bf16.msra.mxu0 %v366
      %390 = vmatprep.subr.bf16.mxu0 0
      %391 = vmatpush1.bf16.msra.mxu0 %v367
      %392 = vmatprep.subr.bf16.mxu0 0
      %393 = vmatpush1.bf16.msra.mxu0 0
      %394 = vmatprep.subr.bf16.mxu0 0
      %395 = vmatpush1.bf16.msra.mxu0 0
      %396 = vmatprep.subr.bf16.mxu0 0
      %397 = vmatpush1.bf16.msra.mxu0 0
      %398 = vmatprep.subr.bf16.mxu0 0
      %399 = vmatpush1.bf16.msra.mxu0 0
      %400 = vmatprep.subr.bf16.mxu0 0
      %401 = vmatpush1.bf16.msra.mxu0 0
      %402 = vmatprep.subr.bf16.mxu0 0
      %403 = vmatpush1.bf16.msra.mxu0 0
      %404 = vmatprep.subr.bf16.mxu0 0
      %405 = vmatpush1.bf16.msra.mxu0 0
      %406 = vmatprep.subr.bf16.mxu0 0
      %407 = vmatpush1.bf16.msra.mxu0 0
      %408 = vmatprep.mubr.bf16.mxu0 0
      %409 = vmatmul.mubr.bf16.gmra.mrb[0].mxu0 %v320
      %v410 = vpop.f32.mrb[0].mxu0
      %v411 = vadd.f32 0.0, %v410
      %v412 = vpop.f32.mrb[0].mxu0
      %v413 = vpop.f32.mrb[0].mxu0
      %v414 = vadd.f32 0.0, %v413
      %v415 = vpop.f32.mrb[0].mxu0
      %416 = vmatprep.mubr.bf16.mxu0 0
      %417 = vmatmul.mubr.bf16.gmra.mrb[0].mxu0 %v321
      %v418 = vpop.f32.mrb[0].mxu0
      %v419 = vadd.f32 0.0, %v418
      %v420 = vpop.f32.mrb[0].mxu0
      %v421 = vpop.f32.mrb[0].mxu0
      %v422 = vadd.f32 0.0, %v421
      %v423 = vpop.f32.mrb[0].mxu0
      %424 = vmatprep.mubr.bf16.mxu0 0
      %425 = vmatmul.mubr.bf16.gmra.mrb[0].mxu0 %v322
      %v426 = vpop.f32.mrb[0].mxu0
      %v427 = vadd.f32 0.0, %v426
      %v428 = vpop.f32.mrb[0].mxu0
      %v429 = vpop.f32.mrb[0].mxu0
      %v430 = vadd.f32 0.0, %v429
      %v431 = vpop.f32.mrb[0].mxu0
      %432 = vmatprep.mubr.bf16.mxu0 0
      %433 = vmatmul.mubr.bf16.gmra.mrb[0].mxu0 %v323
      %v434 = vpop.f32.mrb[0].mxu0
      %v435 = vadd.f32 0.0, %v434
      %v436 = vpop.f32.mrb[0].mxu0
      %v437 = vpop.f32.mrb[0].mxu0
      %v438 = vadd.f32 0.0, %v437
      %v439 = vpop.f32.mrb[0].mxu0
      %440 = vdwg.mxu0
      %v441 = vadd.f32 %v272, %v411
      %v442 = vadd.f32 %v273, %v414
      %v443 = vadd.f32 %v274, %v419
      %v444 = vadd.f32 %v275, %v422
      %v445 = vadd.f32 %v276, %v427
      %v446 = vadd.f32 %v277, %v430
      %v447 = vadd.f32 %v278, %v435
      %v448 = vadd.f32 %v279, %v438
      %449 = vst [vmem:[#allocation2] sm:$0xff] %v441
      %450 = vst [vmem:[#allocation2 + $0x8] sm:$0xff] %v442
      %451 = vst [vmem:[#allocation2 + $0x10] sm:$0xff] %v443
      %452 = vst [vmem:[#allocation2 + $0x18] sm:$0xff] %v444
      %453 = vst [vmem:[#allocation2 + $0x20] sm:$0xff] %v445
      %454 = vst [vmem:[#allocation2 + $0x28] sm:$0xff] %v446
      %455 = vst [vmem:[#allocation2 + $0x30] sm:$0xff] %v447
      %456 = vst [vmem:[#allocation2 + $0x38] sm:$0xff] %v448
      // Predicated region
      $region37: #{conv_encoder_forward.2} parent=31 // pred_check
        %p457 = pneg %p260
      $region38: #{conv_encoder_forward.2} parent=31 // pred_check_branch
        %459 = sbr.rel (%p457) target = $region40
      $region39: #{conv_encoder_forward.2} parent=31 // pred_region
        %v460 = vld [vmem:[#allocation2] sm:$0xff]
        %v461 = vld [vmem:[#allocation2 + $0x8] sm:$0xff]
        %v462 = vld [vmem:[#allocation2 + $0x10] sm:$0xff]
        %v463 = vld [vmem:[#allocation2 + $0x18] sm:$0xff]
        %v464 = vld [vmem:[#allocation2 + $0x20] sm:$0xff]
        %v465 = vld [vmem:[#allocation2 + $0x28] sm:$0xff]
        %v466 = vld [vmem:[#allocation2 + $0x30] sm:$0xff]
        %v467 = vld [vmem:[#allocation2 + $0x38] sm:$0xff]
        %v468 = vld [vmem:[%s249] sm:$0x1]
        %v470 = vlaneseq
        %v471 = vshrl.u32 %v470, 7
        %v472 = vsub.s32 0, %v471
        %v473 = vrot.slane %v468, %v472
        %v475 = vadd.f32 %v460, %v473
        %v476 = vadd.f32 %v461, %v473
        %v477 = vadd.f32 %v462, %v473
        %v478 = vadd.f32 %v463, %v473
        %v479 = vadd.f32 %v464, %v473
        %v480 = vadd.f32 %v465, %v473
        %v481 = vadd.f32 %v466, %v473
        %v482 = vadd.f32 %v467, %v473
        %vm483 = vcmp.gt.f32.partialorder %v475, 0.0
        %vm484 = vcmp.gt.f32.partialorder %v476, 0.0
        %vm485 = vcmp.gt.f32.partialorder %v477, 0.0
        %vm486 = vcmp.gt.f32.partialorder %v478, 0.0
        %vm487 = vcmp.gt.f32.partialorder %v479, 0.0
        %vm488 = vcmp.gt.f32.partialorder %v480, 0.0
        %vm489 = vcmp.gt.f32.partialorder %v481, 0.0
        %vm490 = vcmp.gt.f32.partialorder %v482, 0.0
        %v491 = vmul.f32 %v475, 0.01
        %v492 = vmul.f32 %v476, 0.01
        %v493 = vmul.f32 %v477, 0.01
        %v494 = vmul.f32 %v478, 0.01
        %v495 = vmul.f32 %v479, 0.01
        %v496 = vmul.f32 %v480, 0.01
        %v497 = vmul.f32 %v481, 0.01
        %v498 = vmul.f32 %v482, 0.01
        %v499 = vsel %vm483, %v475, %v491
        %v500 = vsel %vm484, %v476, %v492
        %v501 = vsel %vm485, %v477, %v493
        %v502 = vsel %vm486, %v478, %v494
        %v503 = vsel %vm487, %v479, %v495
        %v504 = vsel %vm488, %v480, %v496
        %v505 = vsel %vm489, %v481, %v497
        %v506 = vsel %vm490, %v482, %v498
        %v507 = vpack.c.bf16 %v500, %v499
        %v508 = vpack.c.bf16 %v502, %v501
        %v509 = vpack.c.bf16 %v504, %v503
        %v510 = vpack.c.bf16 %v506, %v505
        %v515 = vunpack.c.l.b16 %v507
        %v516 = vunpack.c.h.b16 %v507
        %v517 = vunpack.c.l.b16 %v508
        %v518 = vunpack.c.h.b16 %v508
        %v519 = vunpack.c.l.b16 %v509
        %v520 = vunpack.c.h.b16 %v509
        %v521 = vunpack.c.l.b16 %v510
        %v522 = vunpack.c.h.b16 %v510
        %v523 = vpack.c.b16 %v515, %v515
        %v524 = vpack.c.b16 %v516, %v516
        %v525 = vpack.c.b16 %v517, %v517
        %v526 = vpack.c.b16 %v518, %v518
        %v527 = vpack.c.b16 %v519, %v519
        %v528 = vpack.c.b16 %v520, %v520
        %v529 = vpack.c.b16 %v521, %v521
        %v530 = vpack.c.b16 %v522, %v522
        %539 = vst [vmem:[%s257] sm:$0xf] %v523
        %540 = vst [vmem:[%s257 + $0x4] sm:$0xf] %v524
        %541 = vst [vmem:[%s257 + $0x8] sm:$0xf] %v525
        %542 = vst [vmem:[%s257 + $0xc] sm:$0xf] %v526
        %543 = vst [vmem:[%s257 + $0x10] sm:$0xf] %v527
        %544 = vst [vmem:[%s257 + $0x14] sm:$0xf] %v528
        %545 = vst [vmem:[%s257 + $0x18] sm:$0xf] %v529
        %546 = vst [vmem:[%s257 + $0x1c] sm:$0xf] %v530
      $region40: #{conv_encoder_forward.2} parent=31 // pred_fallthru
        _
      %s547 = smul.u32 8, %s19
      %p548 = scmp.lt.s32.totalorder %s547, 15
      %s549 = scalar_select %p548, %s547, 15
      %p550 = scmp.lt.s32.totalorder %s20, 0
      %s551 = scalar_select %p550, %s20, 0
      %s552 = sadd.s32 %s551, %s549
      %s553 = smul.addr %s552, 4
      %s554 = scalar_lea.vmem %s3, %s553
      // Predicated region
      $region41: #{conv_encoder_forward.2} parent=31 // pred_check
        %p555 = pneg %p135
      $region42: #{conv_encoder_forward.2} parent=31 // pred_check_branch
        %557 = sbr.rel (%p555) target = $region44
      $region43: #{conv_encoder_forward.2} parent=31 // pred_region
        %s558 = smul.u32 8, %s19
      $region44: #{conv_encoder_forward.2} parent=31 // pred_fallthru
        _
    $region32: #{conv_encoder_forward.2} parent=5 // pred_fallthru
      _
    %p559 = scmp.le.s32.totalorder 2, %s9
    // Predicated region
    $region45: #{conv_encoder_forward.2} parent=5 // pred_check
      %p560 = pneg %p559
    $region46: #{conv_encoder_forward.2} parent=5 // pred_check_branch
      %562 = sbr.rel (%p560) target = $region48
    $region47: #{conv_encoder_forward.2} parent=5 // pred_region
      %s563 = ssub.s32 %s9, 2
      // Predicated region
      $region49: #{conv_encoder_forward.2} parent=47 // pred_check
        %p564 = pneg %p141
      $region50: #{conv_encoder_forward.2} parent=47 // pred_check_branch
        %566 = sbr.rel (%p564) target = $region52
      $region51: #{conv_encoder_forward.2} parent=47 // pred_region
        %s567 = smul.u32 8, %s22
        %p568 = scmp.lt.s32.totalorder %s567, 15
        %s569 = scalar_select %p568, %s567, 15
        %p570 = scmp.lt.s32.totalorder %s23, 0
        %s571 = scalar_select %p570, %s23, 0
        %s572 = sadd.s32 %s571, %s569
        %s573 = smul.addr %s572, 4
        %s574 = scalar_lea.vmem %s3, %s573
      $region52: #{conv_encoder_forward.2} parent=47 // pred_fallthru
        _
    $region48: #{conv_encoder_forward.2} parent=5 // pred_fallthru
      _
  $region6: #{conv_encoder_forward.2} parent=0 // loop_footer
    %s13 = sadd.s32 1, %s9
  $region7: #{conv_encoder_forward.2} parent=0 // loop_footer_branch
    %8 = sbr.rel target = $region3
  $region8: #{conv_encoder_forward.2} parent=0 // loop_exit
    _

// kernel: conv_encoder_forward.3
$region0: #{conv_encoder_forward.3}
  #allocation0 [shape = 'u32[]', space=smem, size = 0x4, offset = 0x4, fixed_abs, tag = 'smem constant byte address 0x4 - core index']
  #allocation1 [shape = 'u32[144,128]{1,0:T(1,128)}', space=vmem, size = 0x12000, scoped, tag = 'internal scratch']
  #allocation2 [shape = 'f32[16,128]{1,0:T(8,128)}', space=vmem, size = 0x2000, scoped, tag = 'scratch operand']
  %s0 = inlined_call_operand.vmem [shape: bf16[32,2048], index: 0, kind: input, shape index: {}]
  %s1 = inlined_call_operand.vmem [shape: bf16[2048,128], index: 1, kind: input, shape index: {}]
  %s2 = inlined_call_operand.vmem [shape: f32[1,128], index: 2, kind: input, shape index: {}]
  %s3 = inlined_call_operand.vmem [shape: f32[32,128], index: 3, kind: output, shape index: {}]
  %s4 = sld [smem:[#allocation0]]
  $region76: #{conv_encoder_forward.3} parent=0
    _
  %s6 = ssub.s32 1, %s4
  %s7 = scalar_select 0, %s6, %s4
  $region1: #{conv_encoder_forward.3} parent=0
    #allocation3 [shape = 'u8[65536]{0}', space=vmem, size = 0x10000, scoped, tag = 'input window, operand 0']
    loop: start=0, step=1, limit=6
    $region2: #{conv_encoder_forward.3} parent=1 // loop_pre_header
      _
    $region3: #{conv_encoder_forward.3} parent=1 // loop_header
      %s9 = sphi 0, %s13
      %p10 = scmp.ge.s32.totalorder %s9, 6
      %s16 = sphi 0, %s35
      %s17 = sphi 0, %s31
      %s18 = sphi 0, %s27
      %s19 = sphi 0, %s16
      %s20 = sphi 0, %s17
      %s21 = sphi 0, %s18
      %s22 = sphi 0, %s19
      %s23 = sphi 0, %s20
      %s24 = sphi 0, %s21
      %s40 = sphi 0, %s42
      %s43 = sphi 0, %s40
      %s44 = sphi 0, %s43
      %s60 = sphi 0, %s44
      %s68 = sphi 0, %s70
      %s71 = sphi 0, %s68
      %s72 = sphi 0, %s71
      %s88 = sphi 0, %s72
      %s94 = sphi 0, %s96
      %s97 = sphi 0, %s94
      %s98 = sphi 0, %s97
      %s114 = sphi 0, %s98
      %s122 = sphi 0, %s124
      %s125 = sphi 0, %s122
      %s126 = sphi 0, %s125
      %s142 = sphi 0, %s126
    $region4: #{conv_encoder_forward.3} parent=1 // loop_header_branch
      %12 = sbr.rel (%p10) target = $region8
    $region5: #{conv_encoder_forward.3} parent=1 // loop_body
      %s14 = ssub.s32 %s9, 1
      %s15 = ssub.s32 %s9, 2
      %s25 = sadd.s32 1, %s18
      %p26 = scmp.ge.s32.totalorder %s25, 2
      %s27 = scalar_select %p26, 0, %s25
      %s28 = sadd.s32 1, %s17
      %s29 = scalar_select %p26, %s28, %s17
      %p30 = scmp.ge.s32.totalorder %s29, 1
      %s31 = scalar_select %p30, 0, %s29
      %s32 = sadd.s32 1, %s16
      %s33 = scalar_select %p30, %s32, %s16
      %p34 = scmp.ge.s32.totalorder %s33, 2
      %s35 = scalar_select %p34, 0, %s33
      %s36 = ssub.s32 %s16, %s35
      %s37 = ssub.s32 %s18, %s27
      %s38 = sor.u32 %s36, %s37
      %p39 = scmp.eq.s32.totalorder %s38, 0
      %s41 = sadd.s32 %s40, 1
      %s42 = scalar_select %p39, %s40, %s41
      %p45 = pneg %p39
      %p46 = scmp.eq.s32.totalorder %s9, 3
      %p47 = por %p45, %p46
      %p48 = scmp.ne.s32.totalorder %s40, %s43
      %p49 = scmp.eq.s32.totalorder %s9, 0
      %p50 = por %p48, %p49
      %p51 = scmp.ne.s32.totalorder %s40, %s43
      %p52 = scmp.eq.s32.totalorder %s14, 3
      %p53 = por %p51, %p52
      %p54 = scmp.ne.s32.totalorder %s43, %s44
      %p55 = scmp.eq.s32.totalorder %s14, 0
      %p56 = por %p54, %p55
      %p57 = scmp.ne.s32.totalorder %s43, %s44
      %p58 = scmp.eq.s32.totalorder %s15, 3
      %p59 = por %p57, %p58
      %p61 = scmp.ne.s32.totalorder %s44, %s60
      %p62 = scmp.eq.s32.totalorder %s15, 0
      %p63 = por %p61, %p62
      %s64 = ssub.s32 %s18, %s27
      %s65 = ssub.s32 %s17, %s31
      %s66 = sor.u32 %s64, %s65
      %p67 = scmp.eq.s32.totalorder %s66, 0
      %s69 = sadd.s32 %s68, 1
      %s70 = scalar_select %p67, %s68, %s69
      %p73 = pneg %p67
      %p74 = scmp.eq.s32.totalorder %s9, 3
      %p75 = por %p73, %p74
      %p76 = scmp.ne.s32.totalorder %s68, %s71
      %p77 = scmp.eq.s32.totalorder %s9, 0
      %p78 = por %p76, %p77
      %p79 = scmp.ne.s32.totalorder %s68, %s71
      %p80 = scmp.eq.s32.totalorder %s14, 3
      %p81 = por %p79, %p80
      %p82 = scmp.ne.s32.totalorder %s71, %s72
      %p83 = scmp.eq.s32.totalorder %s14, 0
      %p84 = por %p82, %p83
      %p85 = scmp.ne.s32.totalorder %s71, %s72
      %p86 = scmp.eq.s32.totalorder %s15, 3
      %p87 = por %p85, %p86
      %p89 = scmp.ne.s32.totalorder %s72, %s88
      %p90 = scmp.eq.s32.totalorder %s15, 0
      %p91 = por %p89, %p90
      %s92 = ssub.s32 %s17, %s31
      %p93 = scmp.eq.s32.totalorder %s92, 0
      %s95 = sadd.s32 %s94, 1
      %s96 = scalar_select %p93, %s94, %s95
      %p99 = pneg %p93
      %p100 = scmp.eq.s32.totalorder %s9, 3
      %p101 = por %p99, %p100
      %p102 = scmp.ne.s32.totalorder %s94, %s97
      %p103 = scmp.eq.s32.totalorder %s9, 0
      %p104 = por %p102, %p103
      %p105 = scmp.ne.s32.totalorder %s94, %s97
      %p106 = scmp.eq.s32.totalorder %s14, 3
      %p107 = por %p105, %p106
      %p108 = scmp.ne.s32.totalorder %s97, %s98
      %p109 = scmp.eq.s32.totalorder %s14, 0
      %p110 = por %p108, %p109
      %p111 = scmp.ne.s32.totalorder %s97, %s98
      %p112 = scmp.eq.s32.totalorder %s15, 3
      %p113 = por %p111, %p112
      %p115 = scmp.ne.s32.totalorder %s98, %s114
      %p116 = scmp.eq.s32.totalorder %s15, 0
      %p117 = por %p115, %p116
      %s118 = ssub.s32 %s16, %s35
      %s119 = ssub.s32 %s17, %s31
      %s120 = sor.u32 %s118, %s119
      %p121 = scmp.eq.s32.totalorder %s120, 0
      %s123 = sadd.s32 %s122, 1
      %s124 = scalar_select %p121, %s122, %s123
      %p127 = pneg %p121
      %p128 = scmp.eq.s32.totalorder %s9, 3
      %p129 = por %p127, %p128
      %p130 = scmp.ne.s32.totalorder %s122, %s125
      %p131 = scmp.eq.s32.totalorder %s9, 0
      %p132 = por %p130, %p131
      %p133 = scmp.ne.s32.totalorder %s122, %s125
      %p134 = scmp.eq.s32.totalorder %s14, 3
      %p135 = por %p133, %p134
      %p136 = scmp.ne.s32.totalorder %s125, %s126
      %p137 = scmp.eq.s32.totalorder %s14, 0
      %p138 = por %p136, %p137
      %p139 = scmp.ne.s32.totalorder %s125, %s126
      %p140 = scmp.eq.s32.totalorder %s15, 3
      %p141 = por %p139, %p140
      %p143 = scmp.ne.s32.totalorder %s126, %s142
      %p144 = scmp.eq.s32.totalorder %s15, 0
      %p145 = por %p143, %p144
      %p146 = scmp.le.s32.totalorder 1, %s9
      %p147 = scmp.lt.s32.totalorder %s9, 5
      %p148 = pnand %p146, %p147
      %p149 = pneg %p148
      // Predicated region
      $region9: #{conv_encoder_forward.3} parent=5 // pred_check
        _
      $region10: #{conv_encoder_forward.3} parent=5 // pred_check_branch
        %151 = sbr.rel (%p148) target = $region12
      $region11: #{conv_encoder_forward.3} parent=5 // pred_region
        %s152 = ssub.s32 %s9, 1
        // Predicated region
        $region13: #{conv_encoder_forward.3} parent=11 // pred_check
          %p153 = pneg %p110
        $region14: #{conv_encoder_forward.3} parent=11 // pred_check_branch
          %155 = sbr.rel (%p153) target = $region16
        $region15: #{conv_encoder_forward.3} parent=11 // pred_region
          %p156 = scmp.lt.s32.totalorder %s20, 0
          %s157 = scalar_select %p156, %s20, 0
          %s158 = scalar_lea.vmem %s2, %s157
        $region16: #{conv_encoder_forward.3} parent=11 // pred_fallthru
          _
      $region12: #{conv_encoder_forward.3} parent=5 // pred_fallthru
        _
      %p159 = scmp.lt.s32.totalorder %s9, 4
      // Predicated region
      $region17: #{conv_encoder_forward.3} parent=5 // pred_check
        %p160 = pneg %p159
      $region18: #{conv_encoder_forward.3} parent=5 // pred_check_branch
        %162 = sbr.rel (%p160) target = $region20
      $region19: #{conv_encoder_forward.3} parent=5 // pred_region
        // Predicated region
        $region21: #{conv_encoder_forward.3} parent=19 // pred_check
          %p163 = pneg %p50
        $region22: #{conv_encoder_forward.3} parent=19 // pred_check_branch
          %165 = sbr.rel (%p163) target = $region24
        $region23: #{conv_encoder_forward.3} parent=19 // pred_region
          %s166 = sand.u32 %s40, 1
          %s167 = sand.u32 %s40, 1
          %s168 = smul.addr %s167, 64
          %s169 = scalar_lea.vmem [#allocation3], %s168
          %s170 = smul.u32 2, %s16
          %s171 = smul.u32 8, %s18
          %s172 = smul.addr %s170, 16
          %s173 = sadd.s32 %s171, %s172
          %s174 = smul.addr %s173, 4
          %s175 = scalar_lea.vmem %s0, %s174
          // Predicated region
          $region25: #{conv_encoder_forward.3} parent=23 // pred_check
            _
          $region26: #{conv_encoder_forward.3} parent=23 // pred_check_branch
            %177 = sbr.rel (0) target = $region28
          $region27: #{conv_encoder_forward.3} parent=23 // pred_region
            // Predicated region
            $region29: #{conv_encoder_forward.3} parent=27 // pred_check
              _
            $region30: #{conv_encoder_forward.3} parent=27 // pred_check_branch
              %179 = sbr.rel (0) target = $region32
            $region31: #{conv_encoder_forward.3} parent=27 // pred_region
              loop: start=0, step=1, limit=1
              $region33: #{conv_encoder_forward.3} parent=31 // loop_pre_header
                _
              $region34: #{conv_encoder_forward.3} parent=31 // loop_header
                %s181 = sphi 0, %s185
                %p182 = scmp.ge.s32.totalorder %s181, 1
                %s186 = sphi %s175, %s175
                %s187 = sphi %s169, %s169
              $region35: #{conv_encoder_forward.3} parent=31 // loop_header_branch
                %184 = sbr.rel (%p182) target = $region39
              $region36: #{conv_encoder_forward.3} parent=31 // loop_body
                %v188 = vld [vmem:[%s186] sm:$0xff]
                %189 = vst [vmem:[%s187] sm:$0xff] %v188
                %v190 = vld [vmem:[%s186 + $0x8] sm:$0xff]
                %191 = vst [vmem:[%s187 + $0x8] sm:$0xff] %v190
                %v192 = vld [vmem:[%s186 + $0x10] sm:$0xff]
                %193 = vst [vmem:[%s187 + $0x10] sm:$0xff] %v192
                %v194 = vld [vmem:[%s186 + $0x18] sm:$0xff]
                %195 = vst [vmem:[%s187 + $0x18] sm:$0xff] %v194
                %v196 = vld [vmem:[%s186 + $0x40] sm:$0xff]
                %197 = vst [vmem:[%s187 + $0x20] sm:$0xff] %v196
                %v198 = vld [vmem:[%s186 + $0x48] sm:$0xff]
                %199 = vst [vmem:[%s187 + $0x28] sm:$0xff] %v198
                %v200 = vld [vmem:[%s186 + $0x50] sm:$0xff]
                %201 = vst [vmem:[%s187 + $0x30] sm:$0xff] %v200
                %v202 = vld [vmem:[%s186 + $0x58] sm:$0xff]
                %203 = vst [vmem:[%s187 + $0x38] sm:$0xff] %v202
              $region37: #{conv_encoder_forward.3} parent=31 // loop_footer
                %s185 = sadd.s32 1, %s181
              $region38: #{conv_encoder_forward.3} parent=31 // loop_footer_branch
                %180 = sbr.rel target = $region34
              $region39: #{conv_encoder_forward.3} parent=31 // loop_exit
                _
            $region32: #{conv_encoder_forward.3} parent=27 // pred_fallthru
              _
            // Predicated region
            $region40: #{conv_encoder_forward.3} parent=27 // pred_check
              _
            $region41: #{conv_encoder_forward.3} parent=27 // pred_check_branch
              %205 = sbr.rel target = $region43
            $region42: #{conv_encoder_forward.3} parent=27 // pred_region
              _
            $region43: #{conv_encoder_forward.3} parent=27 // pred_fallthru
              _
          $region28: #{conv_encoder_forward.3} parent=23 // pred_fallthru
            _
          %206 = vnop
        $region24: #{conv_encoder_forward.3} parent=19 // pred_fallthru
          _
        // Predicated region
        $region44: #{conv_encoder_forward.3} parent=19 // pred_check
          %p207 = pneg %p78
        $region45: #{conv_encoder_forward.3} parent=19 // pred_check_branch
          %209 = sbr.rel (%p207) target = $region47
        $region46: #{conv_encoder_forward.3} parent=19 // pred_region
          %s210 = smul.u32 128, %s18
          %p211 = scmp.lt.s32.totalorder %s210, 255
          %s212 = scalar_select %p211, %s210, 255
          %p213 = scmp.lt.s32.totalorder %s17, 0
          %s214 = scalar_select %p213, %s17, 0
          %s215 = sadd.s32 %s214, %s212
          %s216 = smul.addr %s215, 4
          %s217 = scalar_lea.vmem %s1, %s216
          %s218 = smul.u32 128, %s18
        $region47: #{conv_encoder_forward.3} parent=19 // pred_fallthru
          _
      $region20: #{conv_encoder_forward.3} parent=5 // pred_fallthru
        _
      %p219 = scmp.le.s32.totalorder 1, %s9
      %p220 = scmp.lt.s32.totalorder %s9, 5
      %p221 = pnand %p219, %p220
      %p222 = pneg %p221
      // Predicated region
      $region48: #{conv_encoder_forward.3} parent=5 // pred_check
        _
      $region49: #{conv_encoder_forward.3} parent=5 // pred_check_branch
        %224 = sbr.rel (%p221) target = $region51
      $region50: #{conv_encoder_forward.3} parent=5 // pred_region
        %s225 = ssub.s32 %s9, 1
        %s226 = sand.u32 %s43, 1
        %s227 = sand.u32 %s43, 1
        %s228 = smul.addr %s227, 64
        %s229 = scalar_lea.vmem [#allocation3], %s228
        // Predicated region
        $region52: #{conv_encoder_forward.3} parent=50 // pred_check
          %p230 = pneg %p56
        $region53: #{conv_encoder_forward.3} parent=50 // pred_check_branch
          %232 = sbr.rel (%p230) target = $region55
        $region54: #{conv_encoder_forward.3} parent=50 // pred_region
          _
        $region55: #{conv_encoder_forward.3} parent=50 // pred_fallthru
          _
        %s233 = sand.u32 %s43, 1
        %s234 = sand.u32 %s43, 1
        %s235 = smul.addr %s234, 64
        %s236 = scalar_lea.vmem [#allocation3], %s235
        %p237 = pneg %p56
        %p238 = pneg %p53
        %s239 = smul.u32 128, %s21
        %p240 = scmp.lt.s32.totalorder %s239, 255
        %s241 = scalar_select %p240, %s239, 255
        %p242 = scmp.lt.s32.totalorder %s20, 0
        %s243 = scalar_select %p242, %s20, 0
        %s244 = sadd.s32 %s243, %s241
        %s245 = smul.addr %s244, 4
        %s246 = scalar_lea.vmem %s1, %s245
        %p247 = pneg %p84
        %p248 = pneg %p81
        %p249 = scmp.lt.s32.totalorder %s20, 0
        %s250 = scalar_select %p249, %s20, 0
        %s251 = scalar_lea.vmem %s2, %s250
        %p252 = pneg %p110
        %p253 = pneg %p107
        %p254 = pneg %p138
        %p255 = pneg %p135
        %s256 = smul.u32 2, %s19
        %p257 = scmp.lt.s32.totalorder %s256, 3
        %s258 = scalar_select %p257, %s256, 3
        %p259 = scmp.lt.s32.totalorder %s20, 0
        %s260 = scalar_select %p259, %s20, 0
        %s261 = sadd.s32 %s260, %s258
        %s262 = smul.addr %s261, 8
        %s263 = scalar_lea.vmem %s3, %s262
        %s264 = smul.u32 2, %s19
        %s265 = smul.u32 8, %s21
        %s266 = smul.u32 128, %s21
        %p267 = scmp.lt.s32.totalorder %s266, 255
        %s268 = scalar_select %p267, %s266, 255
        %p269 = scmp.lt.s32.totalorder %s20, 0
        %s270 = scalar_select %p269, %s20, 0
        %s271 = sadd.s32 %s270, %s268
        %s272 = smul.addr %s271, 4
        %s273 = scalar_lea.vmem %s1, %s272
        %s274 = smul.u32 128, %s21
        %p275 = scmp.lt.s32.totalorder %s20, 0
        %s276 = scalar_select %p275, %s20, 0
        %s277 = scalar_lea.vmem %s2, %s276
        %s278 = smul.u32 2, %s19
        %p279 = scmp.lt.s32.totalorder %s278, 3
        %s280 = scalar_select %p279, %s278, 3
        %p281 = scmp.lt.s32.totalorder %s20, 0
        %s282 = scalar_select %p281, %s20, 0
        %s283 = sadd.s32 %s282, %s280
        %s284 = smul.addr %s283, 8
        %s285 = scalar_lea.vmem %s3, %s284
        %s286 = smul.u32 2, %s19
        %p288 = scmp.eq.s32.totalorder %s21, 0
        // Predicated region
        $region56: #{conv_encoder_forward.3} parent=50 // pred_check
          %p289 = pneg %p288
        $region57: #{conv_encoder_forward.3} parent=50 // pred_check_branch
          %291 = sbr.rel (%p289) target = $region59
        $region58: #{conv_encoder_forward.3} parent=50 // pred_region
          %292 = vst [vmem:[#allocation2] sm:$0xff] 0.0
          %293 = vst [vmem:[#allocation2 + $0x8] sm:$0xff] 0.0
        $region59: #{conv_encoder_forward.3} parent=50 // pred_fallthru
          _
        %v294 = vld [vmem:[#allocation2] sm:$0xff]
        %v295 = vld [vmem:[#allocation2 + $0x8] sm:$0xff]
        %v296 = vld [vmem:[%s229] sm:$0xff]
        %v297 = vld [vmem:[%s229 + $0x8] sm:$0xff]
        %v298 = vld [vmem:[%s229 + $0x10] sm:$0xff]
        %v299 = vld [vmem:[%s229 + $0x18] sm:$0xff]
        %v300 = vld [vmem:[%s229 + $0x20] sm:$0xff]
        %v301 = vld [vmem:[%s229 + $0x28] sm:$0xff]
        %v302 = vld [vmem:[%s229 + $0x30] sm:$0xff]
        %v303 = vld [vmem:[%s229 + $0x38] sm:$0xff]
        %v304 = vld [vmem:[%s273] sm:$0xf]
        %v305 = vld [vmem:[%s273 + $0x4] sm:$0xf]
        %v306 = vld [vmem:[%s273 + $0x8] sm:$0xf]
        %v307 = vld [vmem:[%s273 + $0xc] sm:$0xf]
        %v308 = vld [vmem:[%s273 + $0x10] sm:$0xf]
        %v309 = vld [vmem:[%s273 + $0x14] sm:$0xf]
        %v310 = vld [vmem:[%s273 + $0x18] sm:$0xf]
        %v311 = vld [vmem:[%s273 + $0x1c] sm:$0xf]
        %v312 = vld [vmem:[%s273 + $0x20] sm:$0xf]
        %v313 = vld [vmem:[%s273 + $0x24] sm:$0xf]
        %v314 = vld [vmem:[%s273 + $0x28] sm:$0xf]
        %v315 = vld [vmem:[%s273 + $0x2c] sm:$0xf]
        %v316 = vld [vmem:[%s273 + $0x30] sm:$0xf]
        %v317 = vld [vmem:[%s273 + $0x34] sm:$0xf]
        %v318 = vld [vmem:[%s273 + $0x38] sm:$0xf]
        %v319 = vld [vmem:[%s273 + $0x3c] sm:$0xf]
        %v320 = vld [vmem:[%s273 + $0x40] sm:$0xf]
        %v321 = vld [vmem:[%s273 + $0x44] sm:$0xf]
        %v322 = vld [vmem:[%s273 + $0x48] sm:$0xf]
        %v323 = vld [vmem:[%s273 + $0x4c] sm:$0xf]
        %v324 = vld [vmem:[%s273 + $0x50] sm:$0xf]
        %v325 = vld [vmem:[%s273 + $0x54] sm:$0xf]
        %v326 = vld [vmem:[%s273 + $0x58] sm:$0xf]
        %v327 = vld [vmem:[%s273 + $0x5c] sm:$0xf]
        %v328 = vld [vmem:[%s273 + $0x60] sm:$0xf]
        %v329 = vld [vmem:[%s273 + $0x64] sm:$0xf]
        %v330 = vld [vmem:[%s273 + $0x68] sm:$0xf]
        %v331 = vld [vmem:[%s273 + $0x6c] sm:$0xf]
        %v332 = vld [vmem:[%s273 + $0x70] sm:$0xf]
        %v333 = vld [vmem:[%s273 + $0x74] sm:$0xf]
        %v334 = vld [vmem:[%s273 + $0x78] sm:$0xf]
        %v335 = vld [vmem:[%s273 + $0x7c] sm:$0xf]
        %v336 = vld [vmem:[%s273 + $0x80] sm:$0xf]
        %v337 = vld [vmem:[%s273 + $0x84] sm:$0xf]
        %v338 = vld [vmem:[%s273 + $0x88] sm:$0xf]
        %v339 = vld [vmem:[%s273 + $0x8c] sm:$0xf]
        %v340 = vld [vmem:[%s273 + $0x90] sm:$0xf]
        %v341 = vld [vmem:[%s273 + $0x94] sm:$0xf]
        %v342 = vld [vmem:[%s273 + $0x98] sm:$0xf]
        %v343 = vld [vmem:[%s273 + $0x9c] sm:$0xf]
        %v344 = vld [vmem:[%s273 + $0xa0] sm:$0xf]
        %v345 = vld [vmem:[%s273 + $0xa4] sm:$0xf]
        %v346 = vld [vmem:[%s273 + $0xa8] sm:$0xf]
        %v347 = vld [vmem:[%s273 + $0xac] sm:$0xf]
        %v348 = vld [vmem:[%s273 + $0xb0] sm:$0xf]
        %v349 = vld [vmem:[%s273 + $0xb4] sm:$0xf]
        %v350 = vld [vmem:[%s273 + $0xb8] sm:$0xf]
        %v351 = vld [vmem:[%s273 + $0xbc] sm:$0xf]
        %v352 = vld [vmem:[%s273 + $0xc0] sm:$0xf]
        %v353 = vld [vmem:[%s273 + $0xc4] sm:$0xf]
        %v354 = vld [vmem:[%s273 + $0xc8] sm:$0xf]
        %v355 = vld [vmem:[%s273 + $0xcc] sm:$0xf]
        %v356 = vld [vmem:[%s273 + $0xd0] sm:$0xf]
        %v357 = vld [vmem:[%s273 + $0xd4] sm:$0xf]
        %v358 = vld [vmem:[%s273 + $0xd8] sm:$0xf]
        %v359 = vld [vmem:[%s273 + $0xdc] sm:$0xf]
        %v360 = vld [vmem:[%s273 + $0xe0] sm:$0xf]
        %v361 = vld [vmem:[%s273 + $0xe4] sm:$0xf]
        %v362 = vld [vmem:[%s273 + $0xe8] sm:$0xf]
        %v363 = vld [vmem:[%s273 + $0xec] sm:$0xf]
        %v364 = vld [vmem:[%s273 + $0xf0] sm:$0xf]
        %v365 = vld [vmem:[%s273 + $0xf4] sm:$0xf]
        %v366 = vld [vmem:[%s273 + $0xf8] sm:$0xf]
        %v367 = vld [vmem:[%s273 + $0xfc] sm:$0xf]
        %v368 = vld [vmem:[%s273 + $0x100] sm:$0xf]
        %v369 = vld [vmem:[%s273 + $0x104] sm:$0xf]
        %v370 = vld [vmem:[%s273 + $0x108] sm:$0xf]
        %v371 = vld [vmem:[%s273 + $0x10c] sm:$0xf]
        %v372 = vld [vmem:[%s273 + $0x110] sm:$0xf]
        %v373 = vld [vmem:[%s273 + $0x114] sm:$0xf]
        %v374 = vld [vmem:[%s273 + $0x118] sm:$0xf]
        %v375 = vld [vmem:[%s273 + $0x11c] sm:$0xf]
        %v376 = vld [vmem:[%s273 + $0x120] sm:$0xf]
        %v377 = vld [vmem:[%s273 + $0x124] sm:$0xf]
        %v378 = vld [vmem:[%s273 + $0x128] sm:$0xf]
        %v379 = vld [vmem:[%s273 + $0x12c] sm:$0xf]
        %v380 = vld [vmem:[%s273 + $0x130] sm:$0xf]
        %v381 = vld [vmem:[%s273 + $0x134] sm:$0xf]
        %v382 = vld [vmem:[%s273 + $0x138] sm:$0xf]
        %v383 = vld [vmem:[%s273 + $0x13c] sm:$0xf]
        %v384 = vld [vmem:[%s273 + $0x140] sm:$0xf]
        %v385 = vld [vmem:[%s273 + $0x144] sm:$0xf]
        %v386 = vld [vmem:[%s273 + $0x148] sm:$0xf]
        %v387 = vld [vmem:[%s273 + $0x14c] sm:$0xf]
        %v388 = vld [vmem:[%s273 + $0x150] sm:$0xf]
        %v389 = vld [vmem:[%s273 + $0x154] sm:$0xf]
        %v390 = vld [vmem:[%s273 + $0x158] sm:$0xf]
        %v391 = vld [vmem:[%s273 + $0x15c] sm:$0xf]
        %v392 = vld [vmem:[%s273 + $0x160] sm:$0xf]
        %v393 = vld [vmem:[%s273 + $0x164] sm:$0xf]
        %v394 = vld [vmem:[%s273 + $0x168] sm:$0xf]
        %v395 = vld [vmem:[%s273 + $0x16c] sm:$0xf]
        %v396 = vld [vmem:[%s273 + $0x170] sm:$0xf]
        %v397 = vld [vmem:[%s273 + $0x174] sm:$0xf]
        %v398 = vld [vmem:[%s273 + $0x178] sm:$0xf]
        %v399 = vld [vmem:[%s273 + $0x17c] sm:$0xf]
        %v400 = vld [vmem:[%s273 + $0x180] sm:$0xf]
        %v401 = vld [vmem:[%s273 + $0x184] sm:$0xf]
        %v402 = vld [vmem:[%s273 + $0x188] sm:$0xf]
        %v403 = vld [vmem:[%s273 + $0x18c] sm:$0xf]
        %v404 = vld [vmem:[%s273 + $0x190] sm:$0xf]
        %v405 = vld [vmem:[%s273 + $0x194] sm:$0xf]
        %v406 = vld [vmem:[%s273 + $0x198] sm:$0xf]
        %v407 = vld [vmem:[%s273 + $0x19c] sm:$0xf]
        %v408 = vld [vmem:[%s273 + $0x1a0] sm:$0xf]
        %v409 = vld [vmem:[%s273 + $0x1a4] sm:$0xf]
        %v410 = vld [vmem:[%s273 + $0x1a8] sm:$0xf]
        %v411 = vld [vmem:[%s273 + $0x1ac] sm:$0xf]
        %v412 = vld [vmem:[%s273 + $0x1b0] sm:$0xf]
        %v413 = vld [vmem:[%s273 + $0x1b4] sm:$0xf]
        %v414 = vld [vmem:[%s273 + $0x1b8] sm:$0xf]
        %v415 = vld [vmem:[%s273 + $0x1bc] sm:$0xf]
        %v416 = vld [vmem:[%s273 + $0x1c0] sm:$0xf]
        %v417 = vld [vmem:[%s273 + $0x1c4] sm:$0xf]
        %v418 = vld [vmem:[%s273 + $0x1c8] sm:$0xf]
        %v419 = vld [vmem:[%s273 + $0x1cc] sm:$0xf]
        %v420 = vld [vmem:[%s273 + $0x1d0] sm:$0xf]
        %v421 = vld [vmem:[%s273 + $0x1d4] sm:$0xf]
        %v422 = vld [vmem:[%s273 + $0x1d8] sm:$0xf]
        %v423 = vld [vmem:[%s273 + $0x1dc] sm:$0xf]
        %v424 = vld [vmem:[%s273 + $0x1e0] sm:$0xf]
        %v425 = vld [vmem:[%s273 + $0x1e4] sm:$0xf]
        %v426 = vld [vmem:[%s273 + $0x1e8] sm:$0xf]
        %v427 = vld [vmem:[%s273 + $0x1ec] sm:$0xf]
        %v428 = vld [vmem:[%s273 + $0x1f0] sm:$0xf]
        %v429 = vld [vmem:[%s273 + $0x1f4] sm:$0xf]
        %v430 = vld [vmem:[%s273 + $0x1f8] sm:$0xf]
        %v431 = vld [vmem:[%s273 + $0x1fc] sm:$0xf]
        %v440 = vunpack.c.l.b16 %v296
        %v441 = vunpack.c.h.b16 %v296
        %v442 = vunpack.c.l.b16 %v297
        %v443 = vunpack.c.h.b16 %v297
        %v444 = vunpack.c.l.b16 %v298
        %v445 = vunpack.c.h.b16 %v298
        %v446 = vunpack.c.l.b16 %v299
        %v447 = vunpack.c.h.b16 %v299
        %v448 = vunpack.c.l.b16 %v300
        %v449 = vunpack.c.h.b16 %v300
        %v450 = vunpack.c.l.b16 %v301
        %v451 = vunpack.c.h.b16 %v301
        %v452 = vunpack.c.l.b16 %v302
        %v453 = vunpack.c.h.b16 %v302
        %v454 = vunpack.c.l.b16 %v303
        %v455 = vunpack.c.h.b16 %v303
        %v456 = vpack.c.b16 %v448, %v440
        %v457 = vpack.c.b16 %v449, %v441
        %v458 = vpack.c.b16 %v450, %v442
        %v459 = vpack.c.b16 %v451, %v443
        %v460 = vpack.c.b16 %v452, %v444
        %v461 = vpack.c.b16 %v453, %v445
        %v462 = vpack.c.b16 %v454, %v446
        %v463 = vpack.c.b16 %v455, %v447
        %v600 = vunpack.c.l.b16 %v304
        %v601 = vunpack.c.l.b16 %v305
        %v602 = vunpack.c.l.b16 %v306
        %v603 = vunpack.c.l.b16 %v307
        %v604 = vunpack.c.l.b16 %v308
        %v605 = vunpack.c.l.b16 %v309
        %v606 = vunpack.c.l.b16 %v310
        %v607 = vunpack.c.l.b16 %v311
        %v608 = vunpack.c.l.b16 %v312
        %v609 = vunpack.c.l.b16 %v313
        %v610 = vunpack.c.l.b16 %v314
        %v611 = vunpack.c.l.b16 %v315
        %v612 = vunpack.c.l.b16 %v316
        %v613 = vunpack.c.l.b16 %v317
        %v614 = vunpack.c.l.b16 %v318
        %v615 = vunpack.c.l.b16 %v319
        %v616 = vunpack.c.l.b16 %v320
        %v617 = vunpack.c.l.b16 %v321
        %v618 = vunpack.c.l.b16 %v322
        %v619 = vunpack.c.l.b16 %v323
        %v620 = vunpack.c.l.b16 %v324
        %v621 = vunpack.c.l.b16 %v325
        %v622 = vunpack.c.l.b16 %v326
        %v623 = vunpack.c.l.b16 %v327
        %v624 = vunpack.c.l.b16 %v328
        %v625 = vunpack.c.l.b16 %v329
        %v626 = vunpack.c.l.b16 %v330
        %v627 = vunpack.c.l.b16 %v331
        %v628 = vunpack.c.l.b16 %v332
        %v629 = vunpack.c.l.b16 %v333
        %v630 = vunpack.c.l.b16 %v334
        %v631 = vunpack.c.l.b16 %v335
        %v632 = vunpack.c.l.b16 %v336
        %v633 = vunpack.c.l.b16 %v337
        %v634 = vunpack.c.l.b16 %v338
        %v635 = vunpack.c.l.b16 %v339
        %v636 = vunpack.c.l.b16 %v340
        %v637 = vunpack.c.l.b16 %v341
        %v638 = vunpack.c.l.b16 %v342
        %v639 = vunpack.c.l.b16 %v343
        %v640 = vunpack.c.l.b16 %v344
        %v641 = vunpack.c.l.b16 %v345
        %v642 = vunpack.c.l.b16 %v346
        %v643 = vunpack.c.l.b16 %v347
        %v644 = vunpack.c.l.b16 %v348
        %v645 = vunpack.c.l.b16 %v349
        %v646 = vunpack.c.l.b16 %v350
        %v647 = vunpack.c.l.b16 %v351
        %v648 = vunpack.c.l.b16 %v352
        %v649 = vunpack.c.l.b16 %v353
        %v650 = vunpack.c.l.b16 %v354
        %v651 = vunpack.c.l.b16 %v355
        %v652 = vunpack.c.l.b16 %v356
        %v653 = vunpack.c.l.b16 %v357
        %v654 = vunpack.c.l.b16 %v358
        %v655 = vunpack.c.l.b16 %v359
        %v656 = vunpack.c.l.b16 %v360
        %v657 = vunpack.c.l.b16 %v361
        %v658 = vunpack.c.l.b16 %v362
        %v659 = vunpack.c.l.b16 %v363
        %v660 = vunpack.c.l.b16 %v364
        %v661 = vunpack.c.l.b16 %v365
        %v662 = vunpack.c.l.b16 %v366
        %v663 = vunpack.c.l.b16 %v367
        %v664 = vunpack.c.l.b16 %v368
        %v665 = vunpack.c.l.b16 %v369
        %v666 = vunpack.c.l.b16 %v370
        %v667 = vunpack.c.l.b16 %v371
        %v668 = vunpack.c.l.b16 %v372
        %v669 = vunpack.c.l.b16 %v373
        %v670 = vunpack.c.l.b16 %v374
        %v671 = vunpack.c.l.b16 %v375
        %v672 = vunpack.c.l.b16 %v376
        %v673 = vunpack.c.l.b16 %v377
        %v674 = vunpack.c.l.b16 %v378
        %v675 = vunpack.c.l.b16 %v379
        %v676 = vunpack.c.l.b16 %v380
        %v677 = vunpack.c.l.b16 %v381
        %v678 = vunpack.c.l.b16 %v382
        %v679 = vunpack.c.l.b16 %v383
        %v680 = vunpack.c.l.b16 %v384
        %v681 = vunpack.c.l.b16 %v385
        %v682 = vunpack.c.l.b16 %v386
        %v683 = vunpack.c.l.b16 %v387
        %v684 = vunpack.c.l.b16 %v388
        %v685 = vunpack.c.l.b16 %v389
        %v686 = vunpack.c.l.b16 %v390
        %v687 = vunpack.c.l.b16 %v391
        %v688 = vunpack.c.l.b16 %v392
        %v689 = vunpack.c.l.b16 %v393
        %v690 = vunpack.c.l.b16 %v394
        %v691 = vunpack.c.l.b16 %v395
        %v692 = vunpack.c.l.b16 %v396
        %v693 = vunpack.c.l.b16 %v397
        %v694 = vunpack.c.l.b16 %v398
        %v695 = vunpack.c.l.b16 %v399
        %v696 = vunpack.c.l.b16 %v400
        %v697 = vunpack.c.l.b16 %v401
        %v698 = vunpack.c.l.b16 %v402
        %v699 = vunpack.c.l.b16 %v403
        %v700 = vunpack.c.l.b16 %v404
        %v701 = vunpack.c.l.b16 %v405
        %v702 = vunpack.c.l.b16 %v406
        %v703 = vunpack.c.l.b16 %v407
        %v704 = vunpack.c.l.b16 %v408
        %v705 = vunpack.c.l.b16 %v409
        %v706 = vunpack.c.l.b16 %v410
        %v707 = vunpack.c.l.b16 %v411
        %v708 = vunpack.c.l.b16 %v412
        %v709 = vunpack.c.l.b16 %v413
        %v710 = vunpack.c.l.b16 %v414
        %v711 = vunpack.c.l.b16 %v415
        %v712 = vunpack.c.l.b16 %v416
        %v713 = vunpack.c.l.b16 %v417
        %v714 = vunpack.c.l.b16 %v418
        %v715 = vunpack.c.l.b16 %v419
        %v716 = vunpack.c.l.b16 %v420
        %v717 = vunpack.c.l.b16 %v421
        %v718 = vunpack.c.l.b16 %v422
        %v719 = vunpack.c.l.b16 %v423
        %v720 = vunpack.c.l.b16 %v424
        %v721 = vunpack.c.l.b16 %v425
        %v722 = vunpack.c.l.b16 %v426
        %v723 = vunpack.c.l.b16 %v427
        %v724 = vunpack.c.l.b16 %v428
        %v725 = vunpack.c.l.b16 %v429
        %v726 = vunpack.c.l.b16 %v430
        %v727 = vunpack.c.l.b16 %v431
        %v728 = vpack.c.b16 %v601, %v600
        %v729 = vpack.c.b16 %v603, %v602
        %v730 = vpack.c.b16 %v605, %v604
        %v731 = vpack.c.b16 %v607, %v606
        %v732 = vpack.c.b16 %v609, %v608
        %v733 = vpack.c.b16 %v611, %v610
        %v734 = vpack.c.b16 %v613, %v612
        %v735 = vpack.c.b16 %v615, %v614
        %v736 = vpack.c.b16 %v617, %v616
        %v737 = vpack.c.b16 %v619, %v618
        %v738 = vpack.c.b16 %v621, %v620
        %v739 = vpack.c.b16 %v623, %v622
        %v740 = vpack.c.b16 %v625, %v624
        %v741 = vpack.c.b16 %v627, %v626
        %v742 = vpack.c.b16 %v629, %v628
        %v743 = vpack.c.b16 %v631, %v630
        %v744 = vpack.c.b16 %v633, %v632
        %v745 = vpack.c.b16 %v635, %v634
        %v746 = vpack.c.b16 %v637, %v636
        %v747 = vpack.c.b16 %v639, %v638
        %v748 = vpack.c.b16 %v641, %v640
        %v749 = vpack.c.b16 %v643, %v642
        %v750 = vpack.c.b16 %v645, %v644
        %v751 = vpack.c.b16 %v647, %v646
        %v752 = vpack.c.b16 %v649, %v648
        %v753 = vpack.c.b16 %v651, %v650
        %v754 = vpack.c.b16 %v653, %v652
        %v755 = vpack.c.b16 %v655, %v654
        %v756 = vpack.c.b16 %v657, %v656
        %v757 = vpack.c.b16 %v659, %v658
        %v758 = vpack.c.b16 %v661, %v660
        %v759 = vpack.c.b16 %v663, %v662
        %v760 = vpack.c.b16 %v665, %v664
        %v761 = vpack.c.b16 %v667, %v666
        %v762 = vpack.c.b16 %v669, %v668
        %v763 = vpack.c.b16 %v671, %v670
        %v764 = vpack.c.b16 %v673, %v672
        %v765 = vpack.c.b16 %v675, %v674
        %v766 = vpack.c.b16 %v677, %v676
        %v767 = vpack.c.b16 %v679, %v678
        %v768 = vpack.c.b16 %v681, %v680
        %v769 = vpack.c.b16 %v683, %v682
        %v770 = vpack.c.b16 %v685, %v684
        %v771 = vpack.c.b16 %v687, %v686
        %v772 = vpack.c.b16 %v689, %v688
        %v773 = vpack.c.b16 %v691, %v690
        %v774 = vpack.c.b16 %v693, %v692
        %v775 = vpack.c.b16 %v695, %v694
        %v776 = vpack.c.b16 %v697, %v696
        %v777 = vpack.c.b16 %v699, %v698
        %v778 = vpack.c.b16 %v701, %v700
        %v779 = vpack.c.b16 %v703, %v702
        %v780 = vpack.c.b16 %v705, %v704
        %v781 = vpack.c.b16 %v707, %v706
        %v782 = vpack.c.b16 %v709, %v708
        %v783 = vpack.c.b16 %v711, %v710
        %v784 = vpack.c.b16 %v713, %v712
        %v785 = vpack.c.b16 %v715, %v714
        %v786 = vpack.c.b16 %v717, %v716
        %v787 = vpack.c.b16 %v719, %v718
        %v788 = vpack.c.b16 %v721, %v720
        %v789 = vpack.c.b16 %v723, %v722
        %v790 = vpack.c.b16 %v725, %v724
        %v791 = vpack.c.b16 %v727, %v726
        %856 = vmatprep.subr.bf16.mxu0 0
        %857 = vmatpush1.bf16.msra.mxu0 %v728
        %858 = vmatprep.subr.bf16.mxu0 0
        %859 = vmatpush1.bf16.msra.mxu0 %v729
        %860 = vmatprep.subr.bf16.mxu0 0
        %861 = vmatpush1.bf16.msra.mxu0 %v730
        %862 = vmatprep.subr.bf16.mxu0 0
        %863 = vmatpush1.bf16.msra.mxu0 %v731
        %864 = vmatprep.subr.bf16.mxu0 0
        %865 = vmatpush1.bf16.msra.mxu0 %v732
        %866 = vmatprep.subr.bf16.mxu0 0
        %867 = vmatpush1.bf16.msra.mxu0 %v733
        %868 = vmatprep.subr.bf16.mxu0 0
        %869 = vmatpush1.bf16.msra.mxu0 %v734
        %870 = vmatprep.subr.bf16.mxu0 0
        %871 = vmatpush1.bf16.msra.mxu0 %v735
        %872 = vmatprep.subr.bf16.mxu0 0
        %873 = vmatpush1.bf16.msra.mxu0 %v736
        %874 = vmatprep.subr.bf16.mxu0 0
        %875 = vmatpush1.bf16.msra.mxu0 %v737
        %876 = vmatprep.subr.bf16.mxu0 0
        %877 = vmatpush1.bf16.msra.mxu0 %v738
        %878 = vmatprep.subr.bf16.mxu0 0
        %879 = vmatpush1.bf16.msra.mxu0 %v739
        %880 = vmatprep.subr.bf16.mxu0 0
        %881 = vmatpush1.bf16.msra.mxu0 %v740
        %882 = vmatprep.subr.bf16.mxu0 0
        %883 = vmatpush1.bf16.msra.mxu0 %v741
        %884 = vmatprep.subr.bf16.mxu0 0
        %885 = vmatpush1.bf16.msra.mxu0 %v742
        %886 = vmatprep.subr.bf16.mxu0 0
        %887 = vmatpush1.bf16.msra.mxu0 %v743
        %888 = vmatprep.mubr.bf16.mxu0 %v457
        %889 = vmatmul.mubr.bf16.gmra.mrb[0].mxu0 %v456
        %v890 = vpop.f32.mrb[0].mxu0
        %v891 = vadd.f32 0.0, %v890
        %v892 = vpop.f32.mrb[0].mxu0
        %v893 = vpop.f32.mrb[0].mxu0
        %v894 = vadd.f32 0.0, %v893
        %v895 = vpop.f32.mrb[0].mxu0
        %896 = vdwg.mxu0
        %897 = vmatprep.subr.bf16.mxu0 0
        %898 = vmatpush1.bf16.msra.mxu0 %v744
        %899 = vmatprep.subr.bf16.mxu0 0
        %900 = vmatpush1.bf16.msra.mxu0 %v745
        %901 = vmatprep.subr.bf16.mxu0 0
        %902 = vmatpush1.bf16.msra.mxu0 %v746
        %903 = vmatprep.subr.bf16.mxu0 0
        %904 = vmatpush1.bf16.msra.mxu0 %v747
        %905 = vmatprep.subr.bf16.mxu0 0
        %906 = vmatpush1.bf16.msra.mxu0 %v748
        %907 = vmatprep.subr.bf16.mxu0 0
        %908 = vmatpush1.bf16.msra.mxu0 %v749
        %909 = vmatprep.subr.bf16.mxu0 0
        %910 = vmatpush1.bf16.msra.mxu0 %v750
        %911 = vmatprep.subr.bf16.mxu0 0
        %912 = vmatpush1.bf16.msra.mxu0 %v751
        %913 = vmatprep.subr.bf16.mxu0 0
        %914 = vmatpush1.bf16.msra.mxu0 %v752
        %915 = vmatprep.subr.bf16.mxu0 0
        %916 = vmatpush1.bf16.msra.mxu0 %v753
        %917 = vmatprep.subr.bf16.mxu0 0
        %918 = vmatpush1.bf16.msra.mxu0 %v754
        %919 = vmatprep.subr.bf16.mxu0 0
        %920 = vmatpush1.bf16.msra.mxu0 %v755
        %921 = vmatprep.subr.bf16.mxu0 0
        %922 = vmatpush1.bf16.msra.mxu0 %v756
        %923 = vmatprep.subr.bf16.mxu0 0
        %924 = vmatpush1.bf16.msra.mxu0 %v757
        %925 = vmatprep.subr.bf16.mxu0 0
        %926 = vmatpush1.bf16.msra.mxu0 %v758
        %927 = vmatprep.subr.bf16.mxu0 0
        %928 = vmatpush1.bf16.msra.mxu0 %v759
        %929 = vmatprep.mubr.bf16.mxu0 %v459
        %930 = vmatmul.mubr.bf16.gmra.mrb[0].mxu0 %v458
        %v931 = vpop.f32.mrb[0].mxu0
        %v932 = vadd.f32 %v891, %v931
        %v933 = vpop.f32.mrb[0].mxu0
        %v934 = vpop.f32.mrb[0].mxu0
        %v935 = vadd.f32 %v894, %v934
        %v936 = vpop.f32.mrb[0].mxu0
        %937 = vdwg.mxu0
        %938 = vmatprep.subr.bf16.mxu0 0
        %939 = vmatpush1.bf16.msra.mxu0 %v760
        %940 = vmatprep.subr.bf16.mxu0 0
        %941 = vmatpush1.bf16.msra.mxu0 %v761
        %942 = vmatprep.subr.bf16.mxu0 0
        %943 = vmatpush1.bf16.msra.mxu0 %v762
        %944 = vmatprep.subr.bf16.mxu0 0
        %945 = vmatpush1.bf16.msra.mxu0 %v763
        %946 = vmatprep.subr.bf16.mxu0 0
        %947 = vmatpush1.bf16.msra.mxu0 %v764
        %948 = vmatprep.subr.bf16.mxu0 0
        %949 = vmatpush1.bf16.msra.mxu0 %v765
        %950 = vmatprep.subr.bf16.mxu0 0
        %951 = vmatpush1.bf16.msra.mxu0 %v766
        %952 = vmatprep.subr.bf16.mxu0 0
        %953 = vmatpush1.bf16.msra.mxu0 %v767
        %954 = vmatprep.subr.bf16.mxu0 0
        %955 = vmatpush1.bf16.msra.mxu0 %v768
        %956 = vmatprep.subr.bf16.mxu0 0
        %957 = vmatpush1.bf16.msra.mxu0 %v769
        %958 = vmatprep.subr.bf16.mxu0 0
        %959 = vmatpush1.bf16.msra.mxu0 %v770
        %960 = vmatprep.subr.bf16.mxu0 0
        %961 = vmatpush1.bf16.msra.mxu0 %v771
        %962 = vmatprep.subr.bf16.mxu0 0
        %963 = vmatpush1.bf16.msra.mxu0 %v772
        %964 = vmatprep.subr.bf16.mxu0 0
        %965 = vmatpush1.bf16.msra.mxu0 %v773
        %966 = vmatprep.subr.bf16.mxu0 0
        %967 = vmatpush1.bf16.msra.mxu0 %v774
        %968 = vmatprep.subr.bf16.mxu0 0
        %969 = vmatpush1.bf16.msra.mxu0 %v775
        %970 = vmatprep.mubr.bf16.mxu0 %v461
        %971 = vmatmul.mubr.bf16.gmra.mrb[0].mxu0 %v460
        %v972 = vpop.f32.mrb[0].mxu0
        %v973 = vadd.f32 %v932, %v972
        %v974 = vpop.f32.mrb[0].mxu0
        %v975 = vpop.f32.mrb[0].mxu0
        %v976 = vadd.f32 %v935, %v975
        %v977 = vpop.f32.mrb[0].mxu0
        %978 = vdwg.mxu0
        %979 = vmatprep.subr.bf16.mxu0 0
        %980 = vmatpush1.bf16.msra.mxu0 %v776
        %981 = vmatprep.subr.bf16.mxu0 0
        %982 = vmatpush1.bf16.msra.mxu0 %v777
        %983 = vmatprep.subr.bf16.mxu0 0
        %984 = vmatpush1.bf16.msra.mxu0 %v778
        %985 = vmatprep.subr.bf16.mxu0 0
        %986 = vmatpush1.bf16.msra.mxu0 %v779
        %987 = vmatprep.subr.bf16.mxu0 0
        %988 = vmatpush1.bf16.msra.mxu0 %v780
        %989 = vmatprep.subr.bf16.mxu0 0
        %990 = vmatpush1.bf16.msra.mxu0 %v781
        %991 = vmatprep.subr.bf16.mxu0 0
        %992 = vmatpush1.bf16.msra.mxu0 %v782
        %993 = vmatprep.subr.bf16.mxu0 0
        %994 = vmatpush1.bf16.msra.mxu0 %v783
        %995 = vmatprep.subr.bf16.mxu0 0
        %996 = vmatpush1.bf16.msra.mxu0 %v784
        %997 = vmatprep.subr.bf16.mxu0 0
        %998 = vmatpush1.bf16.msra.mxu0 %v785
        %999 = vmatprep.subr.bf16.mxu0 0
        %1000 = vmatpush1.bf16.msra.mxu0 %v786
        %1001 = vmatprep.subr.bf16.mxu0 0
        %1002 = vmatpush1.bf16.msra.mxu0 %v787
        %1003 = vmatprep.subr.bf16.mxu0 0
        %1004 = vmatpush1.bf16.msra.mxu0 %v788
        %1005 = vmatprep.subr.bf16.mxu0 0
        %1006 = vmatpush1.bf16.msra.mxu0 %v789
        %1007 = vmatprep.subr.bf16.mxu0 0
        %1008 = vmatpush1.bf16.msra.mxu0 %v790
        %1009 = vmatprep.subr.bf16.mxu0 0
        %1010 = vmatpush1.bf16.msra.mxu0 %v791
        %1011 = vmatprep.mubr.bf16.mxu0 %v463
        %1012 = vmatmul.mubr.bf16.gmra.mrb[0].mxu0 %v462
        %v1013 = vpop.f32.mrb[0].mxu0
        %v1014 = vadd.f32 %v973, %v1013
        %v1015 = vpop.f32.mrb[0].mxu0
        %v1016 = vpop.f32.mrb[0].mxu0
        %v1017 = vadd.f32 %v976, %v1016
        %v1018 = vpop.f32.mrb[0].mxu0
        %1019 = vdwg.mxu0
        %v1020 = vadd.f32 %v294, %v1014
        %v1021 = vadd.f32 %v295, %v1017
        %1022 = vst [vmem:[#allocation2] sm:$0xff] %v1020
        %1023 = vst [vmem:[#allocation2 + $0x8] sm:$0xff] %v1021
        %p1024 = scmp.eq.s32.totalorder %s21, 1
        // Predicated region
        $region60: #{conv_encoder_forward.3} parent=50 // pred_check
          %p1025 = pneg %p1024
        $region61: #{conv_encoder_forward.3} parent=50 // pred_check_branch
          %1027 = sbr.rel (%p1025) target = $region63
        $region62: #{conv_encoder_forward.3} parent=50 // pred_region
          %v1028 = vld [vmem:[#allocation2] sm:$0xff]
          %v1029 = vld [vmem:[#allocation2 + $0x8] sm:$0xff]
          %v1030 = vld [vmem:[%s277] sm:$0x1]
          %v1032 = vlaneseq
          %v1033 = vshrl.u32 %v1032, 7
          %v1034 = vsub.s32 0, %v1033
          %v1035 = vrot.slane %v1030, %v1034
          %v1037 = vadd.f32 %v1028, %v1035
          %v1038 = vadd.f32 %v1029, %v1035
          %vm1039 = vcmp.gt.f32.partialorder %v1037, 0.0
          %vm1040 = vcmp.gt.f32.partialorder %v1038, 0.0
          %v1041 = vmul.f32 %v1037, 0.01
          %v1042 = vmul.f32 %v1038, 0.01
          %v1043 = vsel %vm1039, %v1037, %v1041
          %v1044 = vsel %vm1040, %v1038, %v1042
          %1045 = vst [vmem:[%s285] sm:$0xff] %v1043
          %1046 = vst [vmem:[%s285 + $0x8] sm:$0xff] %v1044
        $region63: #{conv_encoder_forward.3} parent=50 // pred_fallthru
          _
        %s1047 = smul.u32 2, %s19
        %p1048 = scmp.lt.s32.totalorder %s1047, 3
        %s1049 = scalar_select %p1048, %s1047, 3
        %p1050 = scmp.lt.s32.totalorder %s20, 0
        %s1051 = scalar_select %p1050, %s20, 0
        %s1052 = sadd.s32 %s1051, %s1049
        %s1053 = smul.addr %s1052, 8
        %s1054 = scalar_lea.vmem %s3, %s1053
        // Predicated region
        $region64: #{conv_encoder_forward.3} parent=50 // pred_check
          %p1055 = pneg %p135
        $region65: #{conv_encoder_forward.3} parent=50 // pred_check_branch
          %1057 = sbr.rel (%p1055) target = $region67
        $region66: #{conv_encoder_forward.3} parent=50 // pred_region
          %s1058 = smul.u32 2, %s19
        $region67: #{conv_encoder_forward.3} parent=50 // pred_fallthru
          _
      $region51: #{conv_encoder_forward.3} parent=5 // pred_fallthru
        _
      %p1059 = scmp.le.s32.totalorder 2, %s9
      // Predicated region
      $region68: #{conv_encoder_forward.3} parent=5 // pred_check
        %p1060 = pneg %p1059
      $region69: #{conv_encoder_forward.3} parent=5 // pred_check_branch
        %1062 = sbr.rel (%p1060) target = $region71
      $region70: #{conv_encoder_forward.3} parent=5 // pred_region
        %s1063 = ssub.s32 %s9, 2
        // Predicated region
        $region72: #{conv_encoder_forward.3} parent=70 // pred_check
          %p1064 = pneg %p141
        $region73: #{conv_encoder_forward.3} parent=70 // pred_check_branch
          %1066 = sbr.rel (%p1064) target = $region75
        $region74: #{conv_encoder_forward.3} parent=70 // pred_region
          %s1067 = smul.u32 2, %s22
          %p1068 = scmp.lt.s32.totalorder %s1067, 3
          %s1069 = scalar_select %p1068, %s1067, 3
          %p1070 = scmp.lt.s32.totalorder %s23, 0
          %s1071 = scalar_select %p1070, %s23, 0
          %s1072 = sadd.s32 %s1071, %s1069
          %s1073 = smul.addr %s1072, 8
          %s1074 = scalar_lea.vmem %s3, %s1073
        $region75: #{conv_encoder_forward.3} parent=70 // pred_fallthru
          _
      $region71: #{conv_encoder_forward.3} parent=5 // pred_fallthru
        _
    $region6: #{conv_encoder_forward.3} parent=1 // loop_footer
      %s13 = sadd.s32 1, %s9
    $region7: #{conv_encoder_forward.3} parent=1 // loop_footer_branch
      %8 = sbr.rel target = $region3
    $region8: #{conv_encoder_forward.3} parent=1 // loop_exit
      _

</llo_original>
